<compile_context>
chip_gen: v7x
topology: tpu7x:2x2x1
jax: 0.10.0
libtpu: 0.0.40
codegen_flags: <defaults>
</compile_context>

<pallas_src>
import jax
import jax.numpy as jnp
from jax import lax
from jax.experimental import pallas as pl
from jax.experimental.pallas import tpu as pltpu

NUM_TASKS = 3
LN_EPS = 1e-5
HEAD_LANES = 128   # lane-dense fused head output: [eci(3) | cwd(2) | ced(2) | zero pad]


# ----------------------------------------------------------------------------
# Pallas kernel: batched PolaLinearAttention fusion + fused task heads
# ----------------------------------------------------------------------------
def _ecimp_fusion_kernel(
    x0_ref, x1_ref,                  # [TB, H] f32 : task-0 (h_eci) / task-1&2 (h_sep)
    ln_g_ref, ln_b_ref,              # [1, H]  f32
    w_qkv_ref, b_qkv_ref,            # [H, 3H] bf16, [1, 3H] f32   (Wq | Wk | Wv)
    w_o_ref, b_o_ref,                # [H, H]  bf16, [1, H]  f32
    w_h0_ref, w_h1_ref, b_h_ref,     # [H,128] bf16 (eci), [H,128] bf16 (cwd+ced), [1,128] f32
    out_ref,                         # [TB, 128] f32
):
    tb, h = x0_ref.shape
    scale = float(h) ** (-0.5)

    def layernorm(x):
        # single-pass statistics: var = E[x^2] - E[x]^2
        mean = jnp.mean(x, axis=-1, keepdims=True)
        meansq = jnp.mean(x * x, axis=-1, keepdims=True)
        var = meansq - mean * mean
        xn = (x - mean) * lax.rsqrt(var + LN_EPS)
        return xn * ln_g_ref[...] + ln_b_ref[...]

    x0 = layernorm(x0_ref[...])      # [TB, H] task-0 (LN'd)
    x1 = layernorm(x1_ref[...])      # [TB, H] task-1 (== task-2) (LN'd)

    def qkv(x):
        r = jnp.dot(x.astype(jnp.bfloat16), w_qkv_ref[...],
                    preferred_element_type=jnp.float32) + b_qkv_ref[...]
        return r[:, 0:h], r[:, h:2 * h], r[:, 2 * h:3 * h]

    q0, k0, v0 = qkv(x0)
    q1, k1, v1 = qkv(x1)             # task-2 q/k/v are identical to task-1

    # Polarity-aware 3x3 attention with duplicated task-2 rows:
    #   score(., 2) == score(., 1) and v2 == v1, so the 3-way softmax collapses:
    #     p0 = e0 / (e0 + 2 e1),   p1 = p2 = e1 / (e0 + 2 e1)
    #     out_t = (p0_pos - p0_neg) * v0 + 2 (p1_pos - p1_neg) * v1
    q0p, q0n = jnp.maximum(q0, 0.0), jnp.maximum(-q0, 0.0)
    q1p, q1n = jnp.maximum(q1, 0.0), jnp.maximum(-q1, 0.0)
    k0p, k0n = jnp.maximum(k0, 0.0), jnp.maximum(-k0, 0.0)
    k1p, k1n = jnp.maximum(k1, 0.0), jnp.maximum(-k1, 0.0)

    def probs(qm, k0m, k1m):
        # [TB,1] softmax probabilities over the (duplicated) key set {0,1,1}
        s0 = jnp.sum(qm * k0m, axis=-1, keepdims=True) * scale
        s1 = jnp.sum(qm * k1m, axis=-1, keepdims=True) * scale
        m = jnp.maximum(s0, s1)
        e0 = jnp.exp(s0 - m)
        e1 = jnp.exp(s1 - m)
        inv = pl.reciprocal(e0 + 2.0 * e1, approx=True)
        return e0 * inv, e1 * inv

    def polar_out(qp, qn):
        p0p, p1p = probs(qp, k0p, k1p)
        p0n, p1n = probs(qn, k0n, k1n)
        w0 = p0p - p0n
        w1 = 2.0 * (p1p - p1n)
        return w0 * v0 + w1 * v1      # [TB, H]

    out0 = polar_out(q0p, q0n)        # task-0 attention output
    out1 = polar_out(q1p, q1n)        # task-1 (== task-2) attention output

    def out_proj(o):
        return jnp.dot(o.astype(jnp.bfloat16), w_o_ref[...],
                       preferred_element_type=jnp.float32) + b_o_ref[...]

    fused0 = x0 + out_proj(out0)      # [TB, H]
    fused1 = x1 + out_proj(out1)      # [TB, H] == fused task-2 features

    # Fused task heads -> one lane-dense [TB, 128] output
    # (cols 0:3 eci on fused0, 3:5 cwd on fused1, 5:7 ced on fused1, rest zero).
    logits = (
        jnp.dot(fused0.astype(jnp.bfloat16), w_h0_ref[...],
                preferred_element_type=jnp.float32)
        + jnp.dot(fused1.astype(jnp.bfloat16), w_h1_ref[...],
                  preferred_element_type=jnp.float32)
        + b_h_ref[...]
    )
    out_ref[...] = logits


def _vmem_limit_bytes():
    try:
        cap = int(pltpu.get_tpu_info().vmem_capacity_bytes)
        return min(int(cap * 0.85), 112 * 1024 * 1024)
    except Exception:
        # Conservative request that fits every generation (v7x has 64 MiB/TC).
        return 48 * 1024 * 1024


def _build_fusion_call(padded_batch, hidden, tb, single_buffer_weights):
    def weight_spec(shape):
        ndim = len(shape)
        idx = lambda i, _n=ndim: (0,) * _n
        if single_buffer_weights:
            # Constant-index weights: double-buffering buys nothing, only VMEM.
            return pl.BlockSpec(shape, idx, pipeline_mode=pl.Buffered(1))
        return pl.BlockSpec(shape, idx)

    def act_spec():
        return pl.BlockSpec((tb, hidden), lambda i: (i, 0))

    in_specs = [
        act_spec(), act_spec(),                                          # x0, x1
        weight_spec((1, hidden)), weight_spec((1, hidden)),              # ln_g, ln_b
        weight_spec((hidden, 3 * hidden)), weight_spec((1, 3 * hidden)), # w_qkv, b_qkv
        weight_spec((hidden, hidden)), weight_spec((1, hidden)),         # w_o, b_o
        weight_spec((hidden, HEAD_LANES)), weight_spec((hidden, HEAD_LANES)),  # w_h0, w_h1
        weight_spec((1, HEAD_LANES)),                                    # b_h
    ]
    out_specs = pl.BlockSpec((tb, HEAD_LANES), lambda i: (i, 0))

    grid_steps = padded_batch // tb
    # Megacore sharding only pays off with >=2 steps per core; otherwise it
    # just duplicates the weight DMA on v7x.
    semantics = ("parallel",) if grid_steps >= 4 else ("arbitrary",)

    return pl.pallas_call(
        _ecimp_fusion_kernel,
        out_shape=jax.ShapeDtypeStruct((padded_batch, HEAD_LANES), jnp.float32),
        grid_spec=pltpu.PrefetchScalarGridSpec(
            num_scalar_prefetch=0,
            grid=(grid_steps,),
            in_specs=in_specs,
            out_specs=out_specs,
        ),
        compiler_params=pltpu.CompilerParams(
            dimension_semantics=semantics,
            vmem_limit_bytes=_vmem_limit_bytes(),
        ),
    )


def _choose_tile_batch(batch, hidden):
    # M = TB per stream matmul; TB=256 matches the 256-wide MXU on v6e/v7x.
    # Keep TB at 128 for very wide models so the tile fits v7x's 64 MiB VMEM.
    cap = 256 if hidden <= 768 else 128
    tb = min(cap, max(8, batch))
    tb = -(-tb // 8) * 8            # sublane-align (multiple of 8)
    return tb


# ----------------------------------------------------------------------------
# Model glue (plain JAX): synthetic backbone, gathers, parameter setup
# ----------------------------------------------------------------------------
def init_params(key, hidden, vocab):
    ks = jax.random.split(key, 16)
    n = lambda k, shp, s=0.05: (s * jax.random.normal(k, shp)).astype(jnp.float32)
    return dict(
        # TODO(synk): pretrained RobertaModel backbone replaced by a synthetic
        # deterministic encoder (embedding + linear + tanh); no checkpoint load.
        emb=n(ks[0], (vocab, hidden)),
        w_enc=n(ks[1], (hidden, hidden)),
        b_enc=jnp.zeros((hidden,), jnp.float32),
        ln_g=jnp.ones((1, hidden), jnp.float32),
        ln_b=jnp.zeros((1, hidden), jnp.float32),
        wq=n(ks[2], (hidden, hidden)), bq=n(ks[3], (1, hidden)),
        wk=n(ks[4], (hidden, hidden)), bk=n(ks[5], (1, hidden)),
        wv=n(ks[6], (hidden, hidden)), bv=n(ks[7], (1, hidden)),
        wo=n(ks[8], (hidden, hidden)), bo=n(ks[9], (1, hidden)),
        w_eci=n(ks[10], (hidden, 3)), b_eci=n(ks[11], (1, 3)),
        w_cwd=n(ks[12], (hidden, 2)), b_cwd=n(ks[13], (1, 2)),
        w_ced=n(ks[14], (hidden, 2)), b_ced=n(ks[15], (1, 2)),
    )


def synthetic_roberta(params, input_ids, attention_mask):
    x = params["emb"][input_ids]                                   # [B, S, H]
    x = jnp.tanh(x @ params["w_enc"] + params["b_enc"])
    return x * attention_mask[..., None].astype(x.dtype)           # [B, S, H]


def ecimp_forward_pallas(params, input_ids, attention_mask, mask_pos, sep_pos):
    seq_out = synthetic_roberta(params, input_ids, attention_mask)  # [B, S, H]
    B, _, H = seq_out.shape
    bidx = jnp.arange(B)
    h_eci = seq_out[bidx, mask_pos]                                 # [B, H] task-0 features
    h_sep = seq_out[bidx, sep_pos]                                  # [B, H] task-1/2 features

    tb = _choose_tile_batch(B, H)
    padded_b = -(-B // tb) * tb
    pad = padded_b - B
    x0 = jnp.pad(h_eci, ((0, pad), (0, 0)))
    x1 = jnp.pad(h_sep, ((0, pad), (0, 0)))

    # Fuse Q/K/V weights into one [H, 3H] bf16 matmul operand (wrapper-side).
    w_qkv = jnp.concatenate([params["wq"], params["wk"], params["wv"]],
                            axis=1).astype(jnp.bfloat16)
    b_qkv = jnp.concatenate([params["bq"], params["bk"], params["bv"]], axis=1)
    w_o = params["wo"].astype(jnp.bfloat16)

    # Fuse the three heads into two zero-padded, lane-dense [H, 128] weights:
    # head0 acts on the task-0 fused features, head1 on the (shared) task-1/2.
    def pad_head(w, col):
        buf = jnp.zeros((H, HEAD_LANES), jnp.float32)
        return buf.at[:, col:col + w.shape[1]].set(w)

    w_h0 = pad_head(params["w_eci"], 0).astype(jnp.bfloat16)
    w_h1 = (pad_head(params["w_cwd"], 3)
            + pad_head(params["w_ced"], 5)).astype(jnp.bfloat16)
    b_h = jnp.zeros((1, HEAD_LANES), jnp.float32)
    b_h = b_h.at[:, 0:3].set(params["b_eci"])
    b_h = b_h.at[:, 3:5].set(params["b_cwd"])
    b_h = b_h.at[:, 5:7].set(params["b_ced"])

    inputs = (x0, x1, params["ln_g"], params["ln_b"],
              w_qkv, b_qkv, w_o, params["bo"], w_h0, w_h1, b_h)

    logits = None
    for single_buffer in (True, False):
        try:
            fn = _build_fusion_call(padded_b, H, tb, single_buffer)
            logits = fn(*inputs)
            break
        except (TypeError, ValueError, NotImplementedError, pltpu.LoweringException):
            # Only the narrow errors an unsupported pipeline_mode=pl.Buffered(1)
            # can raise; genuine compile/VMEM errors propagate (and any error
            # shared by both variants is re-raised on the fallback attempt).
            if not single_buffer:
                raise

    logits = logits[:B]
    return logits[:, 0:3], logits[:, 3:5], logits[:, 5:7]


def ecimp_forward_ref(params, input_ids, attention_mask, mask_pos, sep_pos):
    """Pure-JAX f32 reference mirroring the PyTorch forward semantics."""
    seq_out = synthetic_roberta(params, input_ids, attention_mask)
    B, _, H = seq_out.shape
    bidx = jnp.arange(B)
    h_eci = seq_out[bidx, mask_pos]
    h_sep = seq_out[bidx, sep_pos]
    x = jnp.stack([h_eci, h_sep, h_sep], axis=1)                    # [B, 3, H]

    mean = x.mean(-1, keepdims=True)
    var = ((x - mean) ** 2).mean(-1, keepdims=True)
    x = (x - mean) / jnp.sqrt(var + LN_EPS)
    x = x * params["ln_g"] + params["ln_b"]

    q = x @ params["wq"] + params["bq"]
    k = x @ params["wk"] + params["bk"]
    v = x @ params["wv"] + params["bv"]
    qp, qn = jax.nn.relu(q), jax.nn.relu(-q)
    kp, kn = jax.nn.relu(k), jax.nn.relu(-k)
    scale = H ** (-0.5)
    ap = jax.nn.softmax(jnp.einsum("bth,bsh->bts", qp, kp) * scale, axis=-1)
    an = jax.nn.softmax(jnp.einsum("bth,bsh->bts", qn, kn) * scale, axis=-1)
    out = jnp.einsum("bts,bsh->bth", ap, v) - jnp.einsum("bts,bsh->bth", an, v)
    out = out @ params["wo"] + params["bo"]
    fused = x + out
    eci = fused[:, 0] @ params["w_eci"] + params["b_eci"]
    cwd = fused[:, 1] @ params["w_cwd"] + params["b_cwd"]
    ced = fused[:, 2] @ params["w_ced"] + params["b_ced"]
    return eci, cwd, ced


if __name__ == "__main__":
    B, S, H, VOCAB = 2, 8, 128, 100
    key = jax.random.PRNGKey(0)
    k_param, k_ids = jax.random.split(key)

    params = init_params(k_param, H, VOCAB)
    input_ids = jax.random.randint(k_ids, (B, S), 0, VOCAB, dtype=jnp.int32)
    attention_mask = jnp.ones((B, S), jnp.int32)
    mask_pos = jnp.array([2, 3], dtype=jnp.int32)
    sep_pos = jnp.array([5, 6], dtype=jnp.int32)

    eci, cwd, ced = ecimp_forward_pallas(params, input_ids, attention_mask,
                                         mask_pos, sep_pos)
    jax.block_until_ready((eci, cwd, ced))

    eci_r, cwd_r, ced_r = ecimp_forward_ref(params, input_ids, attention_mask,
                                            mask_pos, sep_pos)
    assert eci.shape == (B, 3) and cwd.shape == (B, 2) and ced.shape == (B, 2)
    # bf16 MXU operands (f32 accumulation): loosen tolerance vs. the f32 reference.
    assert jnp.allclose(eci, eci_r, atol=2e-2, rtol=2e-2), "ECI mismatch"
    assert jnp.allclose(cwd, cwd_r, atol=2e-2, rtol=2e-2), "CWD mismatch"
    assert jnp.allclose(ced, ced_r, atol=2e-2, rtol=2e-2), "CED mismatch"

    print("KERNEL_OK")
</pallas_src>

<mosaic_0001>
module attributes {stable_mosaic.version = 11 : i64} {
  func.func @_ecimp_fusion_kernel(%arg0: i32, %arg1: memref<8x128xf32, #tpu.memory_space<vmem>>, %arg2: memref<8x128xf32, #tpu.memory_space<vmem>>, %arg3: memref<1x128xf32, #tpu.memory_space<vmem>>, %arg4: memref<1x128xf32, #tpu.memory_space<vmem>>, %arg5: memref<128x384xbf16, #tpu.memory_space<vmem>>, %arg6: memref<1x384xf32, #tpu.memory_space<vmem>>, %arg7: memref<128x128xbf16, #tpu.memory_space<vmem>>, %arg8: memref<1x128xf32, #tpu.memory_space<vmem>>, %arg9: memref<128x128xbf16, #tpu.memory_space<vmem>>, %arg10: memref<128x128xbf16, #tpu.memory_space<vmem>>, %arg11: memref<1x128xf32, #tpu.memory_space<vmem>>, %arg12: memref<8x128xf32, #tpu.memory_space<vmem>>) attributes {dimension_semantics = [#tpu.dimension_semantics<arbitrary>], iteration_bounds = array<i64: 1>, scalar_prefetch = 0 : i64, scratch_operands = 0 : i64, tpu.core_type = #tpu.core_type<tc>, window_params = [{transform_indices = @transform_0, window_bounds = array<i64: 8, 128>}, {transform_indices = @transform_1, window_bounds = array<i64: 8, 128>}, {pipeline_mode = #tpu.pipeline_mode<synchronous>, transform_indices = @transform_2, window_bounds = array<i64: 1, 128>}, {pipeline_mode = #tpu.pipeline_mode<synchronous>, transform_indices = @transform_3, window_bounds = array<i64: 1, 128>}, {pipeline_mode = #tpu.pipeline_mode<synchronous>, transform_indices = @transform_4, window_bounds = array<i64: 128, 384>}, {pipeline_mode = #tpu.pipeline_mode<synchronous>, transform_indices = @transform_5, window_bounds = array<i64: 1, 384>}, {pipeline_mode = #tpu.pipeline_mode<synchronous>, transform_indices = @transform_6, window_bounds = array<i64: 128, 128>}, {pipeline_mode = #tpu.pipeline_mode<synchronous>, transform_indices = @transform_7, window_bounds = array<i64: 1, 128>}, {pipeline_mode = #tpu.pipeline_mode<synchronous>, transform_indices = @transform_8, window_bounds = array<i64: 128, 128>}, {pipeline_mode = #tpu.pipeline_mode<synchronous>, transform_indices = @transform_9, window_bounds = array<i64: 128, 128>}, {pipeline_mode = #tpu.pipeline_mode<synchronous>, transform_indices = @transform_10, window_bounds = array<i64: 1, 128>}, {transform_indices = @transform_11, window_bounds = array<i64: 8, 128>}]} {
    %c0 = arith.constant 0 : index
    %c0_0 = arith.constant 0 : index
    %0 = vector.load %arg1[%c0, %c0_0] : memref<8x128xf32, #tpu.memory_space<vmem>>, vector<8x128xf32>
    %cst = arith.constant dense<0.000000e+00> : vector<8xf32>
    %1 = vector.multi_reduction <add>, %0, %cst [1] : vector<8x128xf32> to vector<8xf32>
    %2 = vector.shape_cast %1 : vector<8xf32> to vector<8x1xf32>
    %cst_1 = arith.constant 1.280000e+02 : f32
    %3 = vector.broadcast %cst_1 : f32 to vector<8x1xf32>
    %4 = arith.divf %2, %3 : vector<8x1xf32>
    %5 = arith.mulf %0, %0 : vector<8x128xf32>
    %cst_2 = arith.constant dense<0.000000e+00> : vector<8xf32>
    %6 = vector.multi_reduction <add>, %5, %cst_2 [1] : vector<8x128xf32> to vector<8xf32>
    %7 = vector.shape_cast %6 : vector<8xf32> to vector<8x1xf32>
    %cst_3 = arith.constant 1.280000e+02 : f32
    %8 = vector.broadcast %cst_3 : f32 to vector<8x1xf32>
    %9 = arith.divf %7, %8 : vector<8x1xf32>
    %10 = arith.mulf %4, %4 : vector<8x1xf32>
    %11 = arith.subf %9, %10 : vector<8x1xf32>
    %12 = vector.broadcast %4 : vector<8x1xf32> to vector<8x128xf32>
    %13 = arith.subf %0, %12 : vector<8x128xf32>
    %cst_4 = arith.constant 9.99999974E-6 : f32
    %14 = vector.broadcast %cst_4 : f32 to vector<8x1xf32>
    %15 = arith.addf %11, %14 : vector<8x1xf32>
    %16 = math.rsqrt %15 : vector<8x1xf32>
    %17 = vector.broadcast %16 : vector<8x1xf32> to vector<8x128xf32>
    %18 = arith.mulf %13, %17 : vector<8x128xf32>
    %c0_5 = arith.constant 0 : index
    %c0_6 = arith.constant 0 : index
    %19 = vector.load %arg3[%c0_5, %c0_6] : memref<1x128xf32, #tpu.memory_space<vmem>>, vector<1x128xf32>
    %20 = vector.broadcast %19 : vector<1x128xf32> to vector<8x128xf32>
    %21 = arith.mulf %18, %20 : vector<8x128xf32>
    %c0_7 = arith.constant 0 : index
    %c0_8 = arith.constant 0 : index
    %22 = vector.load %arg4[%c0_7, %c0_8] : memref<1x128xf32, #tpu.memory_space<vmem>>, vector<1x128xf32>
    %23 = vector.broadcast %22 : vector<1x128xf32> to vector<8x128xf32>
    %24 = arith.addf %21, %23 : vector<8x128xf32>
    %c0_9 = arith.constant 0 : index
    %c0_10 = arith.constant 0 : index
    %25 = vector.load %arg2[%c0_9, %c0_10] : memref<8x128xf32, #tpu.memory_space<vmem>>, vector<8x128xf32>
    %cst_11 = arith.constant dense<0.000000e+00> : vector<8xf32>
    %26 = vector.multi_reduction <add>, %25, %cst_11 [1] : vector<8x128xf32> to vector<8xf32>
    %27 = vector.shape_cast %26 : vector<8xf32> to vector<8x1xf32>
    %cst_12 = arith.constant 1.280000e+02 : f32
    %28 = vector.broadcast %cst_12 : f32 to vector<8x1xf32>
    %29 = arith.divf %27, %28 : vector<8x1xf32>
    %30 = arith.mulf %25, %25 : vector<8x128xf32>
    %cst_13 = arith.constant dense<0.000000e+00> : vector<8xf32>
    %31 = vector.multi_reduction <add>, %30, %cst_13 [1] : vector<8x128xf32> to vector<8xf32>
    %32 = vector.shape_cast %31 : vector<8xf32> to vector<8x1xf32>
    %cst_14 = arith.constant 1.280000e+02 : f32
    %33 = vector.broadcast %cst_14 : f32 to vector<8x1xf32>
    %34 = arith.divf %32, %33 : vector<8x1xf32>
    %35 = arith.mulf %29, %29 : vector<8x1xf32>
    %36 = arith.subf %34, %35 : vector<8x1xf32>
    %37 = vector.broadcast %29 : vector<8x1xf32> to vector<8x128xf32>
    %38 = arith.subf %25, %37 : vector<8x128xf32>
    %cst_15 = arith.constant 9.99999974E-6 : f32
    %39 = vector.broadcast %cst_15 : f32 to vector<8x1xf32>
    %40 = arith.addf %36, %39 : vector<8x1xf32>
    %41 = math.rsqrt %40 : vector<8x1xf32>
    %42 = vector.broadcast %41 : vector<8x1xf32> to vector<8x128xf32>
    %43 = arith.mulf %38, %42 : vector<8x128xf32>
    %c0_16 = arith.constant 0 : index
    %c0_17 = arith.constant 0 : index
    %44 = vector.load %arg3[%c0_16, %c0_17] : memref<1x128xf32, #tpu.memory_space<vmem>>, vector<1x128xf32>
    %45 = vector.broadcast %44 : vector<1x128xf32> to vector<8x128xf32>
    %46 = arith.mulf %43, %45 : vector<8x128xf32>
    %c0_18 = arith.constant 0 : index
    %c0_19 = arith.constant 0 : index
    %47 = vector.load %arg4[%c0_18, %c0_19] : memref<1x128xf32, #tpu.memory_space<vmem>>, vector<1x128xf32>
    %48 = vector.broadcast %47 : vector<1x128xf32> to vector<8x128xf32>
    %49 = arith.addf %46, %48 : vector<8x128xf32>
    %50 = arith.truncf %24 : vector<8x128xf32> to vector<8x128xbf16>
    %c0_20 = arith.constant 0 : index
    %c0_21 = arith.constant 0 : index
    %51 = vector.load %arg5[%c0_20, %c0_21] : memref<128x384xbf16, #tpu.memory_space<vmem>>, vector<128x384xbf16>
    %cst_22 = arith.constant dense<0.000000e+00> : vector<8x384xf32>
    %52 = tpu.matmul %50, %51, %cst_22 {dimension_numbers = #tpu.dot_dimension_numbers<[1], [0], [0], [1], [0, 0, 1, 1], [], []>} : vector<8x128xbf16>, vector<128x384xbf16>, vector<8x384xf32> -> vector<8x384xf32>
    %c0_23 = arith.constant 0 : index
    %c0_24 = arith.constant 0 : index
    %53 = vector.load %arg6[%c0_23, %c0_24] : memref<1x384xf32, #tpu.memory_space<vmem>>, vector<1x384xf32>
    %54 = vector.broadcast %53 : vector<1x384xf32> to vector<8x384xf32>
    %55 = arith.addf %52, %54 : vector<8x384xf32>
    %56 = vector.extract_strided_slice %55 {offsets = [0, 0], sizes = [8, 128], strides = [1, 1]} : vector<8x384xf32> to vector<8x128xf32>
    %57 = vector.extract_strided_slice %55 {offsets = [0, 128], sizes = [8, 128], strides = [1, 1]} : vector<8x384xf32> to vector<8x128xf32>
    %58 = vector.extract_strided_slice %55 {offsets = [0, 256], sizes = [8, 128], strides = [1, 1]} : vector<8x384xf32> to vector<8x128xf32>
    %59 = arith.truncf %49 : vector<8x128xf32> to vector<8x128xbf16>
    %c0_25 = arith.constant 0 : index
    %c0_26 = arith.constant 0 : index
    %60 = vector.load %arg5[%c0_25, %c0_26] : memref<128x384xbf16, #tpu.memory_space<vmem>>, vector<128x384xbf16>
    %cst_27 = arith.constant dense<0.000000e+00> : vector<8x384xf32>
    %61 = tpu.matmul %59, %60, %cst_27 {dimension_numbers = #tpu.dot_dimension_numbers<[1], [0], [0], [1], [0, 0, 1, 1], [], []>} : vector<8x128xbf16>, vector<128x384xbf16>, vector<8x384xf32> -> vector<8x384xf32>
    %c0_28 = arith.constant 0 : index
    %c0_29 = arith.constant 0 : index
    %62 = vector.load %arg6[%c0_28, %c0_29] : memref<1x384xf32, #tpu.memory_space<vmem>>, vector<1x384xf32>
    %63 = vector.broadcast %62 : vector<1x384xf32> to vector<8x384xf32>
    %64 = arith.addf %61, %63 : vector<8x384xf32>
    %65 = vector.extract_strided_slice %64 {offsets = [0, 0], sizes = [8, 128], strides = [1, 1]} : vector<8x384xf32> to vector<8x128xf32>
    %66 = vector.extract_strided_slice %64 {offsets = [0, 128], sizes = [8, 128], strides = [1, 1]} : vector<8x384xf32> to vector<8x128xf32>
    %67 = vector.extract_strided_slice %64 {offsets = [0, 256], sizes = [8, 128], strides = [1, 1]} : vector<8x384xf32> to vector<8x128xf32>
    %cst_30 = arith.constant 0.000000e+00 : f32
    %68 = vector.broadcast %cst_30 : f32 to vector<8x128xf32>
    %69 = arith.maximumf %56, %68 : vector<8x128xf32>
    %cst_31 = arith.constant 0.000000e+00 : f32
    %70 = vector.broadcast %cst_31 : f32 to vector<8x128xf32>
    %71 = arith.subf %70, %56 : vector<8x128xf32>
    %cst_32 = arith.constant 0.000000e+00 : f32
    %72 = vector.broadcast %cst_32 : f32 to vector<8x128xf32>
    %73 = arith.maximumf %71, %72 : vector<8x128xf32>
    %cst_33 = arith.constant 0.000000e+00 : f32
    %74 = vector.broadcast %cst_33 : f32 to vector<8x128xf32>
    %75 = arith.maximumf %65, %74 : vector<8x128xf32>
    %cst_34 = arith.constant 0.000000e+00 : f32
    %76 = vector.broadcast %cst_34 : f32 to vector<8x128xf32>
    %77 = arith.subf %76, %65 : vector<8x128xf32>
    %cst_35 = arith.constant 0.000000e+00 : f32
    %78 = vector.broadcast %cst_35 : f32 to vector<8x128xf32>
    %79 = arith.maximumf %77, %78 : vector<8x128xf32>
    %cst_36 = arith.constant 0.000000e+00 : f32
    %80 = vector.broadcast %cst_36 : f32 to vector<8x128xf32>
    %81 = arith.maximumf %57, %80 : vector<8x128xf32>
    %cst_37 = arith.constant 0.000000e+00 : f32
    %82 = vector.broadcast %cst_37 : f32 to vector<8x128xf32>
    %83 = arith.subf %82, %57 : vector<8x128xf32>
    %cst_38 = arith.constant 0.000000e+00 : f32
    %84 = vector.broadcast %cst_38 : f32 to vector<8x128xf32>
    %85 = arith.maximumf %83, %84 : vector<8x128xf32>
    %cst_39 = arith.constant 0.000000e+00 : f32
    %86 = vector.broadcast %cst_39 : f32 to vector<8x128xf32>
    %87 = arith.maximumf %66, %86 : vector<8x128xf32>
    %cst_40 = arith.constant 0.000000e+00 : f32
    %88 = vector.broadcast %cst_40 : f32 to vector<8x128xf32>
    %89 = arith.subf %88, %66 : vector<8x128xf32>
    %cst_41 = arith.constant 0.000000e+00 : f32
    %90 = vector.broadcast %cst_41 : f32 to vector<8x128xf32>
    %91 = arith.maximumf %89, %90 : vector<8x128xf32>
    %92 = arith.mulf %69, %81 : vector<8x128xf32>
    %cst_42 = arith.constant dense<0.000000e+00> : vector<8xf32>
    %93 = vector.multi_reduction <add>, %92, %cst_42 [1] : vector<8x128xf32> to vector<8xf32>
    %94 = vector.shape_cast %93 : vector<8xf32> to vector<8x1xf32>
    %cst_43 = arith.constant 0.0883883461 : f32
    %95 = vector.broadcast %cst_43 : f32 to vector<8x1xf32>
    %96 = arith.mulf %94, %95 : vector<8x1xf32>
    %97 = arith.mulf %69, %87 : vector<8x128xf32>
    %cst_44 = arith.constant dense<0.000000e+00> : vector<8xf32>
    %98 = vector.multi_reduction <add>, %97, %cst_44 [1] : vector<8x128xf32> to vector<8xf32>
    %99 = vector.shape_cast %98 : vector<8xf32> to vector<8x1xf32>
    %cst_45 = arith.constant 0.0883883461 : f32
    %100 = vector.broadcast %cst_45 : f32 to vector<8x1xf32>
    %101 = arith.mulf %99, %100 : vector<8x1xf32>
    %102 = arith.maximumf %96, %101 : vector<8x1xf32>
    %103 = arith.subf %96, %102 : vector<8x1xf32>
    %104 = math.exp %103 : vector<8x1xf32>
    %105 = arith.subf %101, %102 : vector<8x1xf32>
    %106 = math.exp %105 : vector<8x1xf32>
    %cst_46 = arith.constant 2.000000e+00 : f32
    %107 = vector.broadcast %cst_46 : f32 to vector<8x1xf32>
    %108 = arith.mulf %107, %106 : vector<8x1xf32>
    %109 = arith.addf %104, %108 : vector<8x1xf32>
    %110 = tpu.reciprocal %109 {approx = true} : vector<8x1xf32> -> vector<8x1xf32>
    %111 = arith.mulf %104, %110 : vector<8x1xf32>
    %112 = arith.mulf %106, %110 : vector<8x1xf32>
    %113 = arith.mulf %73, %85 : vector<8x128xf32>
    %cst_47 = arith.constant dense<0.000000e+00> : vector<8xf32>
    %114 = vector.multi_reduction <add>, %113, %cst_47 [1] : vector<8x128xf32> to vector<8xf32>
    %115 = vector.shape_cast %114 : vector<8xf32> to vector<8x1xf32>
    %cst_48 = arith.constant 0.0883883461 : f32
    %116 = vector.broadcast %cst_48 : f32 to vector<8x1xf32>
    %117 = arith.mulf %115, %116 : vector<8x1xf32>
    %118 = arith.mulf %73, %91 : vector<8x128xf32>
    %cst_49 = arith.constant dense<0.000000e+00> : vector<8xf32>
    %119 = vector.multi_reduction <add>, %118, %cst_49 [1] : vector<8x128xf32> to vector<8xf32>
    %120 = vector.shape_cast %119 : vector<8xf32> to vector<8x1xf32>
    %cst_50 = arith.constant 0.0883883461 : f32
    %121 = vector.broadcast %cst_50 : f32 to vector<8x1xf32>
    %122 = arith.mulf %120, %121 : vector<8x1xf32>
    %123 = arith.maximumf %117, %122 : vector<8x1xf32>
    %124 = arith.subf %117, %123 : vector<8x1xf32>
    %125 = math.exp %124 : vector<8x1xf32>
    %126 = arith.subf %122, %123 : vector<8x1xf32>
    %127 = math.exp %126 : vector<8x1xf32>
    %cst_51 = arith.constant 2.000000e+00 : f32
    %128 = vector.broadcast %cst_51 : f32 to vector<8x1xf32>
    %129 = arith.mulf %128, %127 : vector<8x1xf32>
    %130 = arith.addf %125, %129 : vector<8x1xf32>
    %131 = tpu.reciprocal %130 {approx = true} : vector<8x1xf32> -> vector<8x1xf32>
    %132 = arith.mulf %125, %131 : vector<8x1xf32>
    %133 = arith.mulf %127, %131 : vector<8x1xf32>
    %134 = arith.subf %111, %132 : vector<8x1xf32>
    %135 = arith.subf %112, %133 : vector<8x1xf32>
    %cst_52 = arith.constant 2.000000e+00 : f32
    %136 = vector.broadcast %cst_52 : f32 to vector<8x1xf32>
    %137 = arith.mulf %136, %135 : vector<8x1xf32>
    %138 = vector.broadcast %134 : vector<8x1xf32> to vector<8x128xf32>
    %139 = arith.mulf %138, %58 : vector<8x128xf32>
    %140 = vector.broadcast %137 : vector<8x1xf32> to vector<8x128xf32>
    %141 = arith.mulf %140, %67 : vector<8x128xf32>
    %142 = arith.addf %139, %141 : vector<8x128xf32>
    %143 = arith.mulf %75, %81 : vector<8x128xf32>
    %cst_53 = arith.constant dense<0.000000e+00> : vector<8xf32>
    %144 = vector.multi_reduction <add>, %143, %cst_53 [1] : vector<8x128xf32> to vector<8xf32>
    %145 = vector.shape_cast %144 : vector<8xf32> to vector<8x1xf32>
    %cst_54 = arith.constant 0.0883883461 : f32
    %146 = vector.broadcast %cst_54 : f32 to vector<8x1xf32>
    %147 = arith.mulf %145, %146 : vector<8x1xf32>
    %148 = arith.mulf %75, %87 : vector<8x128xf32>
    %cst_55 = arith.constant dense<0.000000e+00> : vector<8xf32>
    %149 = vector.multi_reduction <add>, %148, %cst_55 [1] : vector<8x128xf32> to vector<8xf32>
    %150 = vector.shape_cast %149 : vector<8xf32> to vector<8x1xf32>
    %cst_56 = arith.constant 0.0883883461 : f32
    %151 = vector.broadcast %cst_56 : f32 to vector<8x1xf32>
    %152 = arith.mulf %150, %151 : vector<8x1xf32>
    %153 = arith.maximumf %147, %152 : vector<8x1xf32>
    %154 = arith.subf %147, %153 : vector<8x1xf32>
    %155 = math.exp %154 : vector<8x1xf32>
    %156 = arith.subf %152, %153 : vector<8x1xf32>
    %157 = math.exp %156 : vector<8x1xf32>
    %cst_57 = arith.constant 2.000000e+00 : f32
    %158 = vector.broadcast %cst_57 : f32 to vector<8x1xf32>
    %159 = arith.mulf %158, %157 : vector<8x1xf32>
    %160 = arith.addf %155, %159 : vector<8x1xf32>
    %161 = tpu.reciprocal %160 {approx = true} : vector<8x1xf32> -> vector<8x1xf32>
    %162 = arith.mulf %155, %161 : vector<8x1xf32>
    %163 = arith.mulf %157, %161 : vector<8x1xf32>
    %164 = arith.mulf %79, %85 : vector<8x128xf32>
    %cst_58 = arith.constant dense<0.000000e+00> : vector<8xf32>
    %165 = vector.multi_reduction <add>, %164, %cst_58 [1] : vector<8x128xf32> to vector<8xf32>
    %166 = vector.shape_cast %165 : vector<8xf32> to vector<8x1xf32>
    %cst_59 = arith.constant 0.0883883461 : f32
    %167 = vector.broadcast %cst_59 : f32 to vector<8x1xf32>
    %168 = arith.mulf %166, %167 : vector<8x1xf32>
    %169 = arith.mulf %79, %91 : vector<8x128xf32>
    %cst_60 = arith.constant dense<0.000000e+00> : vector<8xf32>
    %170 = vector.multi_reduction <add>, %169, %cst_60 [1] : vector<8x128xf32> to vector<8xf32>
    %171 = vector.shape_cast %170 : vector<8xf32> to vector<8x1xf32>
    %cst_61 = arith.constant 0.0883883461 : f32
    %172 = vector.broadcast %cst_61 : f32 to vector<8x1xf32>
    %173 = arith.mulf %171, %172 : vector<8x1xf32>
    %174 = arith.maximumf %168, %173 : vector<8x1xf32>
    %175 = arith.subf %168, %174 : vector<8x1xf32>
    %176 = math.exp %175 : vector<8x1xf32>
    %177 = arith.subf %173, %174 : vector<8x1xf32>
    %178 = math.exp %177 : vector<8x1xf32>
    %cst_62 = arith.constant 2.000000e+00 : f32
    %179 = vector.broadcast %cst_62 : f32 to vector<8x1xf32>
    %180 = arith.mulf %179, %178 : vector<8x1xf32>
    %181 = arith.addf %176, %180 : vector<8x1xf32>
    %182 = tpu.reciprocal %181 {approx = true} : vector<8x1xf32> -> vector<8x1xf32>
    %183 = arith.mulf %176, %182 : vector<8x1xf32>
    %184 = arith.mulf %178, %182 : vector<8x1xf32>
    %185 = arith.subf %162, %183 : vector<8x1xf32>
    %186 = arith.subf %163, %184 : vector<8x1xf32>
    %cst_63 = arith.constant 2.000000e+00 : f32
    %187 = vector.broadcast %cst_63 : f32 to vector<8x1xf32>
    %188 = arith.mulf %187, %186 : vector<8x1xf32>
    %189 = vector.broadcast %185 : vector<8x1xf32> to vector<8x128xf32>
    %190 = arith.mulf %189, %58 : vector<8x128xf32>
    %191 = vector.broadcast %188 : vector<8x1xf32> to vector<8x128xf32>
    %192 = arith.mulf %191, %67 : vector<8x128xf32>
    %193 = arith.addf %190, %192 : vector<8x128xf32>
    %194 = arith.truncf %142 : vector<8x128xf32> to vector<8x128xbf16>
    %c0_64 = arith.constant 0 : index
    %c0_65 = arith.constant 0 : index
    %195 = vector.load %arg7[%c0_64, %c0_65] : memref<128x128xbf16, #tpu.memory_space<vmem>>, vector<128x128xbf16>
    %cst_66 = arith.constant dense<0.000000e+00> : vector<8x128xf32>
    %196 = tpu.matmul %194, %195, %cst_66 {dimension_numbers = #tpu.dot_dimension_numbers<[1], [0], [0], [1], [0, 0, 1, 1], [], []>} : vector<8x128xbf16>, vector<128x128xbf16>, vector<8x128xf32> -> vector<8x128xf32>
    %c0_67 = arith.constant 0 : index
    %c0_68 = arith.constant 0 : index
    %197 = vector.load %arg8[%c0_67, %c0_68] : memref<1x128xf32, #tpu.memory_space<vmem>>, vector<1x128xf32>
    %198 = vector.broadcast %197 : vector<1x128xf32> to vector<8x128xf32>
    %199 = arith.addf %196, %198 : vector<8x128xf32>
    %200 = arith.addf %24, %199 : vector<8x128xf32>
    %201 = arith.truncf %193 : vector<8x128xf32> to vector<8x128xbf16>
    %c0_69 = arith.constant 0 : index
    %c0_70 = arith.constant 0 : index
    %202 = vector.load %arg7[%c0_69, %c0_70] : memref<128x128xbf16, #tpu.memory_space<vmem>>, vector<128x128xbf16>
    %cst_71 = arith.constant dense<0.000000e+00> : vector<8x128xf32>
    %203 = tpu.matmul %201, %202, %cst_71 {dimension_numbers = #tpu.dot_dimension_numbers<[1], [0], [0], [1], [0, 0, 1, 1], [], []>} : vector<8x128xbf16>, vector<128x128xbf16>, vector<8x128xf32> -> vector<8x128xf32>
    %c0_72 = arith.constant 0 : index
    %c0_73 = arith.constant 0 : index
    %204 = vector.load %arg8[%c0_72, %c0_73] : memref<1x128xf32, #tpu.memory_space<vmem>>, vector<1x128xf32>
    %205 = vector.broadcast %204 : vector<1x128xf32> to vector<8x128xf32>
    %206 = arith.addf %203, %205 : vector<8x128xf32>
    %207 = arith.addf %49, %206 : vector<8x128xf32>
    %208 = arith.truncf %200 : vector<8x128xf32> to vector<8x128xbf16>
    %c0_74 = arith.constant 0 : index
    %c0_75 = arith.constant 0 : index
    %209 = vector.load %arg9[%c0_74, %c0_75] : memref<128x128xbf16, #tpu.memory_space<vmem>>, vector<128x128xbf16>
    %cst_76 = arith.constant dense<0.000000e+00> : vector<8x128xf32>
    %210 = tpu.matmul %208, %209, %cst_76 {dimension_numbers = #tpu.dot_dimension_numbers<[1], [0], [0], [1], [0, 0, 1, 1], [], []>} : vector<8x128xbf16>, vector<128x128xbf16>, vector<8x128xf32> -> vector<8x128xf32>
    %211 = arith.truncf %207 : vector<8x128xf32> to vector<8x128xbf16>
    %c0_77 = arith.constant 0 : index
    %c0_78 = arith.constant 0 : index
    %212 = vector.load %arg10[%c0_77, %c0_78] : memref<128x128xbf16, #tpu.memory_space<vmem>>, vector<128x128xbf16>
    %cst_79 = arith.constant dense<0.000000e+00> : vector<8x128xf32>
    %213 = tpu.matmul %211, %212, %cst_79 {dimension_numbers = #tpu.dot_dimension_numbers<[1], [0], [0], [1], [0, 0, 1, 1], [], []>} : vector<8x128xbf16>, vector<128x128xbf16>, vector<8x128xf32> -> vector<8x128xf32>
    %214 = arith.addf %210, %213 : vector<8x128xf32>
    %c0_80 = arith.constant 0 : index
    %c0_81 = arith.constant 0 : index
    %215 = vector.load %arg11[%c0_80, %c0_81] : memref<1x128xf32, #tpu.memory_space<vmem>>, vector<1x128xf32>
    %216 = vector.broadcast %215 : vector<1x128xf32> to vector<8x128xf32>
    %217 = arith.addf %214, %216 : vector<8x128xf32>
    %c0_82 = arith.constant 0 : index
    %c0_83 = arith.constant 0 : index
    %218 = vector.load %arg12[%c0_82, %c0_83] : memref<8x128xf32, #tpu.memory_space<vmem>>, vector<8x128xf32>
    tpu.vector_store %arg12[%c0_82, %c0_83], %217 {strides = array<i32>} : memref<8x128xf32, #tpu.memory_space<vmem>>, vector<8x128xf32>,
    return
  }
  func.func @transform_0(%arg0: i32) -> (i32, i32) {
    %c0_i32 = arith.constant 0 : i32
    %c0_i32_0 = arith.constant 0 : i32
    return %arg0, %c0_i32 : i32, i32
  }
  func.func @transform_1(%arg0: i32) -> (i32, i32) {
    %c0_i32 = arith.constant 0 : i32
    %c0_i32_0 = arith.constant 0 : i32
    return %arg0, %c0_i32 : i32, i32
  }
  func.func @transform_2(%arg0: i32) -> (i32, i32) {
    %c0_i32 = arith.constant 0 : i32
    %c0_i32_0 = arith.constant 0 : i32
    %c0_i32_1 = arith.constant 0 : i32
    return %c0_i32, %c0_i32_0 : i32, i32
  }
  func.func @transform_3(%arg0: i32) -> (i32, i32) {
    %c0_i32 = arith.constant 0 : i32
    %c0_i32_0 = arith.constant 0 : i32
    %c0_i32_1 = arith.constant 0 : i32
    return %c0_i32, %c0_i32_0 : i32, i32
  }
  func.func @transform_4(%arg0: i32) -> (i32, i32) {
    %c0_i32 = arith.constant 0 : i32
    %c0_i32_0 = arith.constant 0 : i32
    %c0_i32_1 = arith.constant 0 : i32
    return %c0_i32, %c0_i32_0 : i32, i32
  }
  func.func @transform_5(%arg0: i32) -> (i32, i32) {
    %c0_i32 = arith.constant 0 : i32
    %c0_i32_0 = arith.constant 0 : i32
    %c0_i32_1 = arith.constant 0 : i32
    return %c0_i32, %c0_i32_0 : i32, i32
  }
  func.func @transform_6(%arg0: i32) -> (i32, i32) {
    %c0_i32 = arith.constant 0 : i32
    %c0_i32_0 = arith.constant 0 : i32
    %c0_i32_1 = arith.constant 0 : i32
    return %c0_i32, %c0_i32_0 : i32, i32
  }
  func.func @transform_7(%arg0: i32) -> (i32, i32) {
    %c0_i32 = arith.constant 0 : i32
    %c0_i32_0 = arith.constant 0 : i32
    %c0_i32_1 = arith.constant 0 : i32
    return %c0_i32, %c0_i32_0 : i32, i32
  }
  func.func @transform_8(%arg0: i32) -> (i32, i32) {
    %c0_i32 = arith.constant 0 : i32
    %c0_i32_0 = arith.constant 0 : i32
    %c0_i32_1 = arith.constant 0 : i32
    return %c0_i32, %c0_i32_0 : i32, i32
  }
  func.func @transform_9(%arg0: i32) -> (i32, i32) {
    %c0_i32 = arith.constant 0 : i32
    %c0_i32_0 = arith.constant 0 : i32
    %c0_i32_1 = arith.constant 0 : i32
    return %c0_i32, %c0_i32_0 : i32, i32
  }
  func.func @transform_10(%arg0: i32) -> (i32, i32) {
    %c0_i32 = arith.constant 0 : i32
    %c0_i32_0 = arith.constant 0 : i32
    %c0_i32_1 = arith.constant 0 : i32
    return %c0_i32, %c0_i32_0 : i32, i32
  }
  func.func @transform_11(%arg0: i32) -> (i32, i32) {
    %c0_i32 = arith.constant 0 : i32
    %c0_i32_0 = arith.constant 0 : i32
    return %arg0, %c0_i32 : i32, i32
  }
}

</mosaic_0001>

<llo_original>
// kernel: tpu_custom_call.1
$region0: #{tpu_custom_call.1}
  #allocation0 [shape = 'u32[]', space=smem, size = 0x4, offset = 0x4, fixed_abs, tag = 'smem constant byte address 0x4 - core index']
  #allocation1 [shape = 'u32[144,128]{1,0:T(1,128)}', space=vmem, size = 0x12000, scoped, tag = 'internal scratch']
  %s0 = inlined_call_operand.hbm [shape: f32[8,128], index: 0, kind: input, shape index: {}]
  %s1 = inlined_call_operand.hbm [shape: f32[8,128], index: 1, kind: input, shape index: {}]
  %s2 = inlined_call_operand.vmem [shape: f32[1,128], index: 2, kind: input, shape index: {}]
  %s3 = inlined_call_operand.vmem [shape: f32[1,128], index: 3, kind: input, shape index: {}]
  %s4 = inlined_call_operand.hbm [shape: bf16[128,384], index: 4, kind: input, shape index: {}]
  %s5 = inlined_call_operand.vmem [shape: f32[1,384], index: 5, kind: input, shape index: {}]
  %s6 = inlined_call_operand.hbm [shape: bf16[128,128], index: 6, kind: input, shape index: {}]
  %s7 = inlined_call_operand.vmem [shape: f32[1,128], index: 7, kind: input, shape index: {}]
  %s8 = inlined_call_operand.hbm [shape: bf16[128,128], index: 8, kind: input, shape index: {}]
  %s9 = inlined_call_operand.hbm [shape: bf16[128,128], index: 9, kind: input, shape index: {}]
  %s10 = inlined_call_operand.vmem [shape: f32[1,128], index: 10, kind: input, shape index: {}]
  %s11 = inlined_call_operand.hbm [shape: f32[8,128], index: 11, kind: output, shape index: {}]
  %s12 = sld [smem:[#allocation0]]
  $region78: #{tpu_custom_call.1} parent=0
    _
  %s14 = ssub.s32 1, %s12
  %s15 = scalar_select 0, %s14, %s12
  $region1: #{tpu_custom_call.1} parent=0
    #allocation2 [shape = 'u8[4096]{0}', space=vmem, size = 0x1000, scoped, tag = 'input window, operand 0, single buffered']
    #allocation3 [shape = 's32[1]{0}', space=sflag, size = 0x4, scoped, tag = 'scoped memory for tpu_custom_call.1']
    #allocation4 [shape = 's32[1]{0}', space=sflag, size = 0x4, scoped, tag = 'scoped memory for tpu_custom_call.1']
    #allocation5 [shape = 'u8[4096]{0}', space=vmem, size = 0x1000, scoped, tag = 'input window, operand 1, single buffered']
    #allocation6 [shape = 's32[1]{0}', space=sflag, size = 0x4, scoped, tag = 'scoped memory for tpu_custom_call.1']
    #allocation7 [shape = 'u8[98304]{0}', space=vmem, size = 0x18000, scoped, tag = 'input window, operand 4, single buffered']
    #allocation8 [shape = 'u8[32768]{0}', space=vmem, size = 0x8000, scoped, tag = 'input window, operand 6, single buffered']
    #allocation9 [shape = 's32[1]{0}', space=sflag, size = 0x4, scoped, tag = 'scoped memory for tpu_custom_call.1']
    #allocation10 [shape = 'u8[32768]{0}', space=vmem, size = 0x8000, scoped, tag = 'input window, operand 8, single buffered']
    #allocation11 [shape = 'u8[32768]{0}', space=vmem, size = 0x8000, scoped, tag = 'input window, operand 9, single buffered']
    #allocation12 [shape = 's32[1]{0}', space=sflag, size = 0x4, scoped, tag = 'scoped memory for tpu_custom_call.1']
    #allocation13 [shape = 'u8[4096]{0}', space=vmem, size = 0x1000, scoped, tag = 'output window, operand 0, single buffered']
    %16 = vsyncpa [#allocation3], 0
    %17 = vsyncpa [#allocation6], 0
    %18 = vsyncpa [#allocation9], 0
    %19 = vsyncpa [#allocation12], 0
    %20 = vsyncpa [#allocation4], 0
    // Predicated region
    $region2: #{tpu_custom_call.1} parent=1 // pred_check
      _
    $region3: #{tpu_custom_call.1} parent=1 // pred_check_branch
      %22 = sbr.rel (0) target = $region5
    $region4: #{tpu_custom_call.1} parent=1 // pred_region
      %s24 = ssub.s32 128, 128
      %25 = vsyncadd [#allocation3], %s24
      %s27 = sshll.u32 [#allocation2], 4
      %s28 = int_to_ptr.vmem [resolvable:$true] %s27
      %30 = dma.hbm_to_vmem [thread:$0]  %s0, 128, %s28, [#allocation3]
    $region5: #{tpu_custom_call.1} parent=1 // pred_fallthru
      _
    // Predicated region
    $region6: #{tpu_custom_call.1} parent=1 // pred_check
      _
    $region7: #{tpu_custom_call.1} parent=1 // pred_check_branch
      %32 = sbr.rel (0) target = $region9
    $region8: #{tpu_custom_call.1} parent=1 // pred_region
      %s34 = ssub.s32 128, 128
      %35 = vsyncadd [#allocation6], %s34
      %s37 = sshll.u32 [#allocation5], 4
      %s38 = int_to_ptr.vmem [resolvable:$true] %s37
      %40 = dma.hbm_to_vmem [thread:$0]  %s1, 128, %s38, [#allocation6]
    $region9: #{tpu_custom_call.1} parent=1 // pred_fallthru
      _
    // Predicated region
    $region10: #{tpu_custom_call.1} parent=1 // pred_check
      _
    $region11: #{tpu_custom_call.1} parent=1 // pred_check_branch
      %42 = sbr.rel (0) target = $region13
    $region12: #{tpu_custom_call.1} parent=1 // pred_region
      _
    $region13: #{tpu_custom_call.1} parent=1 // pred_fallthru
      _
    // Predicated region
    $region14: #{tpu_custom_call.1} parent=1 // pred_check
      _
    $region15: #{tpu_custom_call.1} parent=1 // pred_check_branch
      %44 = sbr.rel (0) target = $region17
    $region16: #{tpu_custom_call.1} parent=1 // pred_region
      _
    $region17: #{tpu_custom_call.1} parent=1 // pred_fallthru
      _
    // Predicated region
    $region18: #{tpu_custom_call.1} parent=1 // pred_check
      _
    $region19: #{tpu_custom_call.1} parent=1 // pred_check_branch
      %46 = sbr.rel (0) target = $region21
    $region20: #{tpu_custom_call.1} parent=1 // pred_region
      %s48 = ssub.s32 3072, 3072
      %49 = vsyncadd [#allocation6], %s48
      %s50 = sshll.u32 [#allocation7], 4
      %s51 = int_to_ptr.vmem [resolvable:$true] %s50
      %56 = dma.hbm_to_vmem [thread:$0]  %s4, 3072, %s51, [#allocation6], 192, 192, 12
    $region21: #{tpu_custom_call.1} parent=1 // pred_fallthru
      _
    // Predicated region
    $region22: #{tpu_custom_call.1} parent=1 // pred_check
      _
    $region23: #{tpu_custom_call.1} parent=1 // pred_check_branch
      %58 = sbr.rel (0) target = $region25
    $region24: #{tpu_custom_call.1} parent=1 // pred_region
      _
    $region25: #{tpu_custom_call.1} parent=1 // pred_fallthru
      _
    // Predicated region
    $region26: #{tpu_custom_call.1} parent=1 // pred_check
      _
    $region27: #{tpu_custom_call.1} parent=1 // pred_check_branch
      %60 = sbr.rel (0) target = $region29
    $region28: #{tpu_custom_call.1} parent=1 // pred_region
      %s62 = ssub.s32 1024, 1024
      %63 = vsyncadd [#allocation9], %s62
      %s64 = sshll.u32 [#allocation8], 4
      %s65 = int_to_ptr.vmem [resolvable:$true] %s64
      %70 = dma.hbm_to_vmem [thread:$0]  %s6, 1024, %s65, [#allocation9], 64, 64, 4
    $region29: #{tpu_custom_call.1} parent=1 // pred_fallthru
      _
    // Predicated region
    $region30: #{tpu_custom_call.1} parent=1 // pred_check
      _
    $region31: #{tpu_custom_call.1} parent=1 // pred_check_branch
      %72 = sbr.rel (0) target = $region33
    $region32: #{tpu_custom_call.1} parent=1 // pred_region
      _
    $region33: #{tpu_custom_call.1} parent=1 // pred_fallthru
      _
    // Predicated region
    $region34: #{tpu_custom_call.1} parent=1 // pred_check
      _
    $region35: #{tpu_custom_call.1} parent=1 // pred_check_branch
      %74 = sbr.rel (0) target = $region37
    $region36: #{tpu_custom_call.1} parent=1 // pred_region
      %s76 = ssub.s32 1024, 1024
      %77 = vsyncadd [#allocation9], %s76
      %s78 = sshll.u32 [#allocation10], 4
      %s79 = int_to_ptr.vmem [resolvable:$true] %s78
      %84 = dma.hbm_to_vmem [thread:$0]  %s8, 1024, %s79, [#allocation9], 64, 64, 4
    $region37: #{tpu_custom_call.1} parent=1 // pred_fallthru
      _
    // Predicated region
    $region38: #{tpu_custom_call.1} parent=1 // pred_check
      _
    $region39: #{tpu_custom_call.1} parent=1 // pred_check_branch
      %86 = sbr.rel (0) target = $region41
    $region40: #{tpu_custom_call.1} parent=1 // pred_region
      %s88 = ssub.s32 1024, 1024
      %89 = vsyncadd [#allocation12], %s88
      %s90 = sshll.u32 [#allocation11], 4
      %s91 = int_to_ptr.vmem [resolvable:$true] %s90
      %96 = dma.hbm_to_vmem [thread:$0]  %s9, 1024, %s91, [#allocation12], 64, 64, 4
    $region41: #{tpu_custom_call.1} parent=1 // pred_fallthru
      _
    // Predicated region
    $region42: #{tpu_custom_call.1} parent=1 // pred_check
      _
    $region43: #{tpu_custom_call.1} parent=1 // pred_check_branch
      %98 = sbr.rel (0) target = $region45
    $region44: #{tpu_custom_call.1} parent=1 // pred_region
      _
    $region45: #{tpu_custom_call.1} parent=1 // pred_fallthru
      _
    // Predicated region
    $region46: #{tpu_custom_call.1} parent=1 // pred_check
      _
    $region47: #{tpu_custom_call.1} parent=1 // pred_check_branch
      %100 = sbr.rel (0) target = $region49
    $region48: #{tpu_custom_call.1} parent=1 // pred_region
      %101 = dma.done [#allocation3], 128
    $region49: #{tpu_custom_call.1} parent=1 // pred_fallthru
      _
    // Predicated region
    $region50: #{tpu_custom_call.1} parent=1 // pred_check
      _
    $region51: #{tpu_custom_call.1} parent=1 // pred_check_branch
      %103 = sbr.rel (0) target = $region53
    $region52: #{tpu_custom_call.1} parent=1 // pred_region
      %104 = dma.done [#allocation6], 128
    $region53: #{tpu_custom_call.1} parent=1 // pred_fallthru
      _
    // Predicated region
    $region54: #{tpu_custom_call.1} parent=1 // pred_check
      _
    $region55: #{tpu_custom_call.1} parent=1 // pred_check_branch
      %106 = sbr.rel (0) target = $region57
    $region56: #{tpu_custom_call.1} parent=1 // pred_region
      %107 = dma.done [#allocation6], 3072
    $region57: #{tpu_custom_call.1} parent=1 // pred_fallthru
      _
    // Predicated region
    $region58: #{tpu_custom_call.1} parent=1 // pred_check
      _
    $region59: #{tpu_custom_call.1} parent=1 // pred_check_branch
      %109 = sbr.rel (0) target = $region61
    $region60: #{tpu_custom_call.1} parent=1 // pred_region
      %110 = dma.done [#allocation9], 1024
    $region61: #{tpu_custom_call.1} parent=1 // pred_fallthru
      _
    // Predicated region
    $region62: #{tpu_custom_call.1} parent=1 // pred_check
      _
    $region63: #{tpu_custom_call.1} parent=1 // pred_check_branch
      %112 = sbr.rel (0) target = $region65
    $region64: #{tpu_custom_call.1} parent=1 // pred_region
      %113 = dma.done [#allocation9], 1024
    $region65: #{tpu_custom_call.1} parent=1 // pred_fallthru
      _
    // Predicated region
    $region66: #{tpu_custom_call.1} parent=1 // pred_check
      _
    $region67: #{tpu_custom_call.1} parent=1 // pred_check_branch
      %115 = sbr.rel (0) target = $region69
    $region68: #{tpu_custom_call.1} parent=1 // pred_region
      %116 = dma.done [#allocation12], 1024
    $region69: #{tpu_custom_call.1} parent=1 // pred_fallthru
      _
    %v118 = vld [vmem:[#allocation2] sm:$0xff]
    %119 = vadd.xlane.f32.xlu0 %v118
    %v120 = vpop.xlane.xlu0 %119
    %v121 = vrcp.pop 128.0
    %v122 = vmul.f32 %v120, %v121
    %v123 = vmul.f32 %v118, %v118
    %124 = vadd.xlane.f32.xlu0 %v123
    %v125 = vpop.xlane.xlu0 %124
    %v126 = vmul.f32 %v125, %v121
    %v127 = vmul.f32 %v122, %v122
    %v128 = vsub.f32 %v126, %v127
    %v129 = vsub.f32 %v118, %v122
    %v130 = vadd.f32 %v128, 1e-05
    %v131 = vrsqrt.pop %v130
    %v132 = vmul.f32 %v129, %v131
    %v133 = vld [vmem:[%s2] sm:$0x1]
    %v135 = vlaneseq
    %v136 = vshrl.u32 %v135, 7
    %v137 = vsub.s32 0, %v136
    %v138 = vrot.slane %v133, %v137
    %v140 = vmul.f32 %v132, %v138
    %v141 = vld [vmem:[%s3] sm:$0x1]
    %v143 = vlaneseq
    %v144 = vshrl.u32 %v143, 7
    %v145 = vsub.s32 0, %v144
    %v146 = vrot.slane %v141, %v145
    %v148 = vadd.f32 %v140, %v146
    %v149 = vld [vmem:[#allocation5] sm:$0xff]
    %150 = vadd.xlane.f32.xlu0 %v149
    %v151 = vpop.xlane.xlu0 %150
    %v152 = vmul.f32 %v151, %v121
    %v153 = vmul.f32 %v149, %v149
    %154 = vadd.xlane.f32.xlu0 %v153
    %v155 = vpop.xlane.xlu0 %154
    %v156 = vmul.f32 %v155, %v121
    %v157 = vmul.f32 %v152, %v152
    %v158 = vsub.f32 %v156, %v157
    %v159 = vsub.f32 %v149, %v152
    %v160 = vadd.f32 %v158, 1e-05
    %v161 = vrsqrt.pop %v160
    %v162 = vmul.f32 %v159, %v161
    %v163 = vmul.f32 %v162, %v138
    %v164 = vadd.f32 %v163, %v146
    %v165 = vpack.c.bf16 %v148, %v148
    %v166 = vld [vmem:[#allocation7] sm:$0xff]
    %v167 = vld [vmem:[#allocation7 + $0x8] sm:$0xf]
    %v168 = vld [vmem:[#allocation7 + $0xc] sm:$0xff]
    %v169 = vld [vmem:[#allocation7 + $0x14] sm:$0xf]
    %v170 = vld [vmem:[#allocation7 + $0x18] sm:$0xff]
    %v171 = vld [vmem:[#allocation7 + $0x20] sm:$0xf]
    %v172 = vld [vmem:[#allocation7 + $0x24] sm:$0xff]
    %v173 = vld [vmem:[#allocation7 + $0x2c] sm:$0xf]
    %v174 = vld [vmem:[#allocation7 + $0x30] sm:$0xff]
    %v175 = vld [vmem:[#allocation7 + $0x38] sm:$0xf]
    %v176 = vld [vmem:[#allocation7 + $0x3c] sm:$0xff]
    %v177 = vld [vmem:[#allocation7 + $0x44] sm:$0xf]
    %v178 = vld [vmem:[#allocation7 + $0x48] sm:$0xff]
    %v179 = vld [vmem:[#allocation7 + $0x50] sm:$0xf]
    %v180 = vld [vmem:[#allocation7 + $0x54] sm:$0xff]
    %v181 = vld [vmem:[#allocation7 + $0x5c] sm:$0xf]
    %v182 = vld [vmem:[#allocation7 + $0x60] sm:$0xff]
    %v183 = vld [vmem:[#allocation7 + $0x68] sm:$0xf]
    %v184 = vld [vmem:[#allocation7 + $0x6c] sm:$0xff]
    %v185 = vld [vmem:[#allocation7 + $0x74] sm:$0xf]
    %v186 = vld [vmem:[#allocation7 + $0x78] sm:$0xff]
    %v187 = vld [vmem:[#allocation7 + $0x80] sm:$0xf]
    %v188 = vld [vmem:[#allocation7 + $0x84] sm:$0xff]
    %v189 = vld [vmem:[#allocation7 + $0x8c] sm:$0xf]
    %v190 = vld [vmem:[#allocation7 + $0x90] sm:$0xff]
    %v191 = vld [vmem:[#allocation7 + $0x98] sm:$0xf]
    %v192 = vld [vmem:[#allocation7 + $0x9c] sm:$0xff]
    %v193 = vld [vmem:[#allocation7 + $0xa4] sm:$0xf]
    %v194 = vld [vmem:[#allocation7 + $0xa8] sm:$0xff]
    %v195 = vld [vmem:[#allocation7 + $0xb0] sm:$0xf]
    %v196 = vld [vmem:[#allocation7 + $0xb4] sm:$0xff]
    %v197 = vld [vmem:[#allocation7 + $0xbc] sm:$0xf]
    %v198 = vld [vmem:[%s5] sm:$0x7]
    %v200 = vlaneseq
    %v201 = vshrl.u32 %v200, 7
    %v202 = vsub.s32 0, %v201
    %v203 = vrot.slane %v198, %v202
    %v204 = vlaneseq
    %v205 = vshrl.u32 %v204, 7
    %v206 = vsub.s32 1, %v205
    %v207 = vrot.slane %v198, %v206
    %v208 = vlaneseq
    %v209 = vshrl.u32 %v208, 7
    %v210 = vsub.s32 2, %v209
    %v211 = vrot.slane %v198, %v210
    %v247 = vunpack.c.l.b16 %v166
    %v248 = vunpack.c.h.b16 %v166
    %v249 = vunpack.c.l.b16 %v167
    %v250 = vunpack.c.l.b16 %v168
    %v251 = vunpack.c.h.b16 %v168
    %v252 = vunpack.c.l.b16 %v169
    %v253 = vunpack.c.l.b16 %v170
    %v254 = vunpack.c.h.b16 %v170
    %v255 = vunpack.c.l.b16 %v171
    %v256 = vunpack.c.l.b16 %v172
    %v257 = vunpack.c.h.b16 %v172
    %v258 = vunpack.c.l.b16 %v173
    %v259 = vunpack.c.l.b16 %v174
    %v260 = vunpack.c.h.b16 %v174
    %v261 = vunpack.c.l.b16 %v175
    %v262 = vunpack.c.l.b16 %v176
    %v263 = vunpack.c.h.b16 %v176
    %v264 = vunpack.c.l.b16 %v177
    %v265 = vunpack.c.l.b16 %v178
    %v266 = vunpack.c.h.b16 %v178
    %v267 = vunpack.c.l.b16 %v179
    %v268 = vunpack.c.l.b16 %v180
    %v269 = vunpack.c.h.b16 %v180
    %v270 = vunpack.c.l.b16 %v181
    %v271 = vunpack.c.l.b16 %v182
    %v272 = vunpack.c.h.b16 %v182
    %v273 = vunpack.c.l.b16 %v183
    %v274 = vunpack.c.l.b16 %v184
    %v275 = vunpack.c.h.b16 %v184
    %v276 = vunpack.c.l.b16 %v185
    %v277 = vunpack.c.l.b16 %v186
    %v278 = vunpack.c.h.b16 %v186
    %v279 = vunpack.c.l.b16 %v187
    %v280 = vunpack.c.l.b16 %v188
    %v281 = vunpack.c.h.b16 %v188
    %v282 = vunpack.c.l.b16 %v189
    %v283 = vunpack.c.l.b16 %v190
    %v284 = vunpack.c.h.b16 %v190
    %v285 = vunpack.c.l.b16 %v191
    %v286 = vunpack.c.l.b16 %v192
    %v287 = vunpack.c.h.b16 %v192
    %v288 = vunpack.c.l.b16 %v193
    %v289 = vunpack.c.l.b16 %v194
    %v290 = vunpack.c.h.b16 %v194
    %v291 = vunpack.c.l.b16 %v195
    %v292 = vunpack.c.l.b16 %v196
    %v293 = vunpack.c.h.b16 %v196
    %v294 = vunpack.c.l.b16 %v197
    %v295 = vpack.c.b16 %v250, %v247
    %v296 = vpack.c.b16 %v251, %v248
    %v297 = vpack.c.b16 %v252, %v249
    %v298 = vpack.c.b16 %v256, %v253
    %v299 = vpack.c.b16 %v257, %v254
    %v300 = vpack.c.b16 %v258, %v255
    %v301 = vpack.c.b16 %v262, %v259
    %v302 = vpack.c.b16 %v263, %v260
    %v303 = vpack.c.b16 %v264, %v261
    %v304 = vpack.c.b16 %v268, %v265
    %v305 = vpack.c.b16 %v269, %v266
    %v306 = vpack.c.b16 %v270, %v267
    %v307 = vpack.c.b16 %v274, %v271
    %v308 = vpack.c.b16 %v275, %v272
    %v309 = vpack.c.b16 %v276, %v273
    %v310 = vpack.c.b16 %v280, %v277
    %v311 = vpack.c.b16 %v281, %v278
    %v312 = vpack.c.b16 %v282, %v279
    %v313 = vpack.c.b16 %v286, %v283
    %v314 = vpack.c.b16 %v287, %v284
    %v315 = vpack.c.b16 %v288, %v285
    %v316 = vpack.c.b16 %v292, %v289
    %v317 = vpack.c.b16 %v293, %v290
    %v318 = vpack.c.b16 %v294, %v291
    %343 = vmatprep.subr.bf16.mxu0 %v296
    %344 = vmatpush1.bf16.msra.mxu0 %v295
    %345 = vmatprep.subr.bf16.mxu0 %v299
    %346 = vmatpush1.bf16.msra.mxu0 %v298
    %347 = vmatprep.subr.bf16.mxu0 %v302
    %348 = vmatpush1.bf16.msra.mxu0 %v301
    %349 = vmatprep.subr.bf16.mxu0 %v305
    %350 = vmatpush1.bf16.msra.mxu0 %v304
    %351 = vmatprep.subr.bf16.mxu0 %v308
    %352 = vmatpush1.bf16.msra.mxu0 %v307
    %353 = vmatprep.subr.bf16.mxu0 %v311
    %354 = vmatpush1.bf16.msra.mxu0 %v310
    %355 = vmatprep.subr.bf16.mxu0 %v314
    %356 = vmatpush1.bf16.msra.mxu0 %v313
    %357 = vmatprep.subr.bf16.mxu0 %v317
    %358 = vmatpush1.bf16.msra.mxu0 %v316
    %359 = vmatprep.subr.bf16.mxu0 0
    %360 = vmatpush1.bf16.msra.mxu0 0
    %361 = vmatprep.subr.bf16.mxu0 0
    %362 = vmatpush1.bf16.msra.mxu0 0
    %363 = vmatprep.subr.bf16.mxu0 0
    %364 = vmatpush1.bf16.msra.mxu0 0
    %365 = vmatprep.subr.bf16.mxu0 0
    %366 = vmatpush1.bf16.msra.mxu0 0
    %367 = vmatprep.subr.bf16.mxu0 0
    %368 = vmatpush1.bf16.msra.mxu0 0
    %369 = vmatprep.subr.bf16.mxu0 0
    %370 = vmatpush1.bf16.msra.mxu0 0
    %371 = vmatprep.subr.bf16.mxu0 0
    %372 = vmatpush1.bf16.msra.mxu0 0
    %373 = vmatprep.subr.bf16.mxu0 0
    %374 = vmatpush1.bf16.msra.mxu0 0
    %375 = vmatprep.mubr.bf16.mxu0 0
    %376 = vmatmul.mubr.bf16.gmra.mrb[0].mxu0 %v165
    %v377 = vpop.f32.mrb[0].mxu0
    %v378 = vadd.f32 %v203, %v377
    %v379 = vpop.f32.mrb[0].mxu0
    %v380 = vadd.f32 %v207, %v379
    %v381 = vpop.f32.mrb[0].mxu0
    %v382 = vpop.f32.mrb[0].mxu0
    %383 = vdwg.mxu0
    %384 = vmatprep.subr.bf16.mxu0 0
    %385 = vmatpush1.bf16.msra.mxu0 %v297
    %386 = vmatprep.subr.bf16.mxu0 0
    %387 = vmatpush1.bf16.msra.mxu0 %v300
    %388 = vmatprep.subr.bf16.mxu0 0
    %389 = vmatpush1.bf16.msra.mxu0 %v303
    %390 = vmatprep.subr.bf16.mxu0 0
    %391 = vmatpush1.bf16.msra.mxu0 %v306
    %392 = vmatprep.subr.bf16.mxu0 0
    %393 = vmatpush1.bf16.msra.mxu0 %v309
    %394 = vmatprep.subr.bf16.mxu0 0
    %395 = vmatpush1.bf16.msra.mxu0 %v312
    %396 = vmatprep.subr.bf16.mxu0 0
    %397 = vmatpush1.bf16.msra.mxu0 %v315
    %398 = vmatprep.subr.bf16.mxu0 0
    %399 = vmatpush1.bf16.msra.mxu0 %v318
    %400 = vmatprep.subr.bf16.mxu0 0
    %401 = vmatpush1.bf16.msra.mxu0 0
    %402 = vmatprep.subr.bf16.mxu0 0
    %403 = vmatpush1.bf16.msra.mxu0 0
    %404 = vmatprep.subr.bf16.mxu0 0
    %405 = vmatpush1.bf16.msra.mxu0 0
    %406 = vmatprep.subr.bf16.mxu0 0
    %407 = vmatpush1.bf16.msra.mxu0 0
    %408 = vmatprep.subr.bf16.mxu0 0
    %409 = vmatpush1.bf16.msra.mxu0 0
    %410 = vmatprep.subr.bf16.mxu0 0
    %411 = vmatpush1.bf16.msra.mxu0 0
    %412 = vmatprep.subr.bf16.mxu0 0
    %413 = vmatpush1.bf16.msra.mxu0 0
    %414 = vmatprep.subr.bf16.mxu0 0
    %415 = vmatpush1.bf16.msra.mxu0 0
    %416 = vmatprep.mubr.bf16.mxu0 0
    %417 = vmatmul.mubr.bf16.gmra.mrb[0].mxu0 %v165
    %v418 = vpop.f32.mrb[0].mxu0
    %v419 = vadd.f32 %v211, %v418
    %v420 = vpop.f32.mrb[0].mxu0
    %v421 = vpop.f32.mrb[0].mxu0
    %v422 = vpop.f32.mrb[0].mxu0
    %423 = vdwg.mxu0
    %v424 = vpack.c.bf16 %v164, %v164
    %425 = vmatprep.subr.bf16.mxu0 %v296
    %426 = vmatpush1.bf16.msra.mxu0 %v295
    %427 = vmatprep.subr.bf16.mxu0 %v299
    %428 = vmatpush1.bf16.msra.mxu0 %v298
    %429 = vmatprep.subr.bf16.mxu0 %v302
    %430 = vmatpush1.bf16.msra.mxu0 %v301
    %431 = vmatprep.subr.bf16.mxu0 %v305
    %432 = vmatpush1.bf16.msra.mxu0 %v304
    %433 = vmatprep.subr.bf16.mxu0 %v308
    %434 = vmatpush1.bf16.msra.mxu0 %v307
    %435 = vmatprep.subr.bf16.mxu0 %v311
    %436 = vmatpush1.bf16.msra.mxu0 %v310
    %437 = vmatprep.subr.bf16.mxu0 %v314
    %438 = vmatpush1.bf16.msra.mxu0 %v313
    %439 = vmatprep.subr.bf16.mxu0 %v317
    %440 = vmatpush1.bf16.msra.mxu0 %v316
    %441 = vmatprep.subr.bf16.mxu0 0
    %442 = vmatpush1.bf16.msra.mxu0 0
    %443 = vmatprep.subr.bf16.mxu0 0
    %444 = vmatpush1.bf16.msra.mxu0 0
    %445 = vmatprep.subr.bf16.mxu0 0
    %446 = vmatpush1.bf16.msra.mxu0 0
    %447 = vmatprep.subr.bf16.mxu0 0
    %448 = vmatpush1.bf16.msra.mxu0 0
    %449 = vmatprep.subr.bf16.mxu0 0
    %450 = vmatpush1.bf16.msra.mxu0 0
    %451 = vmatprep.subr.bf16.mxu0 0
    %452 = vmatpush1.bf16.msra.mxu0 0
    %453 = vmatprep.subr.bf16.mxu0 0
    %454 = vmatpush1.bf16.msra.mxu0 0
    %455 = vmatprep.subr.bf16.mxu0 0
    %456 = vmatpush1.bf16.msra.mxu0 0
    %457 = vmatprep.mubr.bf16.mxu0 0
    %458 = vmatmul.mubr.bf16.gmra.mrb[0].mxu0 %v424
    %v459 = vpop.f32.mrb[0].mxu0
    %v460 = vadd.f32 %v203, %v459
    %v461 = vpop.f32.mrb[0].mxu0
    %v462 = vadd.f32 %v207, %v461
    %v463 = vpop.f32.mrb[0].mxu0
    %v464 = vpop.f32.mrb[0].mxu0
    %465 = vdwg.mxu0
    %466 = vmatprep.subr.bf16.mxu0 0
    %467 = vmatpush1.bf16.msra.mxu0 %v297
    %468 = vmatprep.subr.bf16.mxu0 0
    %469 = vmatpush1.bf16.msra.mxu0 %v300
    %470 = vmatprep.subr.bf16.mxu0 0
    %471 = vmatpush1.bf16.msra.mxu0 %v303
    %472 = vmatprep.subr.bf16.mxu0 0
    %473 = vmatpush1.bf16.msra.mxu0 %v306
    %474 = vmatprep.subr.bf16.mxu0 0
    %475 = vmatpush1.bf16.msra.mxu0 %v309
    %476 = vmatprep.subr.bf16.mxu0 0
    %477 = vmatpush1.bf16.msra.mxu0 %v312
    %478 = vmatprep.subr.bf16.mxu0 0
    %479 = vmatpush1.bf16.msra.mxu0 %v315
    %480 = vmatprep.subr.bf16.mxu0 0
    %481 = vmatpush1.bf16.msra.mxu0 %v318
    %482 = vmatprep.subr.bf16.mxu0 0
    %483 = vmatpush1.bf16.msra.mxu0 0
    %484 = vmatprep.subr.bf16.mxu0 0
    %485 = vmatpush1.bf16.msra.mxu0 0
    %486 = vmatprep.subr.bf16.mxu0 0
    %487 = vmatpush1.bf16.msra.mxu0 0
    %488 = vmatprep.subr.bf16.mxu0 0
    %489 = vmatpush1.bf16.msra.mxu0 0
    %490 = vmatprep.subr.bf16.mxu0 0
    %491 = vmatpush1.bf16.msra.mxu0 0
    %492 = vmatprep.subr.bf16.mxu0 0
    %493 = vmatpush1.bf16.msra.mxu0 0
    %494 = vmatprep.subr.bf16.mxu0 0
    %495 = vmatpush1.bf16.msra.mxu0 0
    %496 = vmatprep.subr.bf16.mxu0 0
    %497 = vmatpush1.bf16.msra.mxu0 0
    %498 = vmatprep.mubr.bf16.mxu0 0
    %499 = vmatmul.mubr.bf16.gmra.mrb[0].mxu0 %v424
    %v500 = vpop.f32.mrb[0].mxu0
    %v501 = vadd.f32 %v211, %v500
    %v502 = vpop.f32.mrb[0].mxu0
    %v503 = vpop.f32.mrb[0].mxu0
    %v504 = vpop.f32.mrb[0].mxu0
    %505 = vdwg.mxu0
    %v506 = vmax.f32 %v378, 0.0
    %v507 = vsub.f32 0.0, %v378
    %v508 = vmax.f32 %v507, 0.0
    %v509 = vmax.f32 %v460, 0.0
    %v510 = vsub.f32 0.0, %v460
    %v511 = vmax.f32 %v510, 0.0
    %v512 = vmax.f32 %v380, 0.0
    %v513 = vsub.f32 0.0, %v380
    %v514 = vmax.f32 %v513, 0.0
    %v515 = vmax.f32 %v462, 0.0
    %v516 = vsub.f32 0.0, %v462
    %v517 = vmax.f32 %v516, 0.0
    %v518 = vmul.f32 %v506, %v512
    %519 = vadd.xlane.f32.xlu0 %v518
    %v520 = vpop.xlane.xlu0 %519
    %v521 = vmul.f32 %v520, 0.088388346
    %v522 = vmul.f32 %v506, %v515
    %523 = vadd.xlane.f32.xlu0 %v522
    %v524 = vpop.xlane.xlu0 %523
    %v525 = vmul.f32 %v524, 0.088388346
    %v526 = vmax.f32 %v521, %v525
    %v527 = vsub.f32 %v521, %v526
    %v528 = vmul.f32 %v527, 1.442695
    %v529 = vpow.pop %v528
    %v530 = vsub.f32 %v525, %v526
    %v531 = vmul.f32 %v530, 1.442695
    %v532 = vpow.pop %v531
    %v533 = vmul.f32 %v532, 2.0
    %v534 = vadd.f32 %v529, %v533
    %v535 = vrcp.pop %v534
    %v536 = vmul.f32 %v529, %v535
    %v537 = vmul.f32 %v532, %v535
    %v538 = vmul.f32 %v508, %v514
    %539 = vadd.xlane.f32.xlu0 %v538
    %v540 = vpop.xlane.xlu0 %539
    %v541 = vmul.f32 %v540, 0.088388346
    %v542 = vmul.f32 %v508, %v517
    %543 = vadd.xlane.f32.xlu0 %v542
    %v544 = vpop.xlane.xlu0 %543
    %v545 = vmul.f32 %v544, 0.088388346
    %v546 = vmax.f32 %v541, %v545
    %v547 = vsub.f32 %v541, %v546
    %v548 = vmul.f32 %v547, 1.442695
    %v549 = vpow.pop %v548
    %v550 = vsub.f32 %v545, %v546
    %v551 = vmul.f32 %v550, 1.442695
    %v552 = vpow.pop %v551
    %v553 = vmul.f32 %v552, 2.0
    %v554 = vadd.f32 %v549, %v553
    %v555 = vrcp.pop %v554
    %v556 = vmul.f32 %v549, %v555
    %v557 = vmul.f32 %v552, %v555
    %v558 = vsub.f32 %v536, %v556
    %v559 = vsub.f32 %v537, %v557
    %v560 = vmul.f32 %v559, 2.0
    %v561 = vmul.f32 %v558, %v419
    %v562 = vmul.f32 %v560, %v501
    %v563 = vadd.f32 %v561, %v562
    %v564 = vmul.f32 %v509, %v512
    %565 = vadd.xlane.f32.xlu0 %v564
    %v566 = vpop.xlane.xlu0 %565
    %v567 = vmul.f32 %v566, 0.088388346
    %v568 = vmul.f32 %v509, %v515
    %569 = vadd.xlane.f32.xlu0 %v568
    %v570 = vpop.xlane.xlu0 %569
    %v571 = vmul.f32 %v570, 0.088388346
    %v572 = vmax.f32 %v567, %v571
    %v573 = vsub.f32 %v567, %v572
    %v574 = vmul.f32 %v573, 1.442695
    %v575 = vpow.pop %v574
    %v576 = vsub.f32 %v571, %v572
    %v577 = vmul.f32 %v576, 1.442695
    %v578 = vpow.pop %v577
    %v579 = vmul.f32 %v578, 2.0
    %v580 = vadd.f32 %v575, %v579
    %v581 = vrcp.pop %v580
    %v582 = vmul.f32 %v575, %v581
    %v583 = vmul.f32 %v578, %v581
    %v584 = vmul.f32 %v511, %v514
    %585 = vadd.xlane.f32.xlu0 %v584
    %v586 = vpop.xlane.xlu0 %585
    %v587 = vmul.f32 %v586, 0.088388346
    %v588 = vmul.f32 %v511, %v517
    %589 = vadd.xlane.f32.xlu0 %v588
    %v590 = vpop.xlane.xlu0 %589
    %v591 = vmul.f32 %v590, 0.088388346
    %v592 = vmax.f32 %v587, %v591
    %v593 = vsub.f32 %v587, %v592
    %v594 = vmul.f32 %v593, 1.442695
    %v595 = vpow.pop %v594
    %v596 = vsub.f32 %v591, %v592
    %v597 = vmul.f32 %v596, 1.442695
    %v598 = vpow.pop %v597
    %v599 = vmul.f32 %v598, 2.0
    %v600 = vadd.f32 %v595, %v599
    %v601 = vrcp.pop %v600
    %v602 = vmul.f32 %v595, %v601
    %v603 = vmul.f32 %v598, %v601
    %v604 = vsub.f32 %v582, %v602
    %v605 = vsub.f32 %v583, %v603
    %v606 = vmul.f32 %v605, 2.0
    %v607 = vmul.f32 %v604, %v419
    %v608 = vmul.f32 %v606, %v501
    %v609 = vadd.f32 %v607, %v608
    %v610 = vpack.c.bf16 %v563, %v563
    %v611 = vld [vmem:[#allocation8] sm:$0xf]
    %v612 = vld [vmem:[#allocation8 + $0x4] sm:$0xf]
    %v613 = vld [vmem:[#allocation8 + $0x8] sm:$0xf]
    %v614 = vld [vmem:[#allocation8 + $0xc] sm:$0xf]
    %v615 = vld [vmem:[#allocation8 + $0x10] sm:$0xf]
    %v616 = vld [vmem:[#allocation8 + $0x14] sm:$0xf]
    %v617 = vld [vmem:[#allocation8 + $0x18] sm:$0xf]
    %v618 = vld [vmem:[#allocation8 + $0x1c] sm:$0xf]
    %v619 = vld [vmem:[#allocation8 + $0x20] sm:$0xf]
    %v620 = vld [vmem:[#allocation8 + $0x24] sm:$0xf]
    %v621 = vld [vmem:[#allocation8 + $0x28] sm:$0xf]
    %v622 = vld [vmem:[#allocation8 + $0x2c] sm:$0xf]
    %v623 = vld [vmem:[#allocation8 + $0x30] sm:$0xf]
    %v624 = vld [vmem:[#allocation8 + $0x34] sm:$0xf]
    %v625 = vld [vmem:[#allocation8 + $0x38] sm:$0xf]
    %v626 = vld [vmem:[#allocation8 + $0x3c] sm:$0xf]
    %v627 = vld [vmem:[%s7] sm:$0x1]
    %v629 = vlaneseq
    %v630 = vshrl.u32 %v629, 7
    %v631 = vsub.s32 0, %v630
    %v632 = vrot.slane %v627, %v631
    %v650 = vunpack.c.l.b16 %v611
    %v651 = vunpack.c.l.b16 %v612
    %v652 = vunpack.c.l.b16 %v613
    %v653 = vunpack.c.l.b16 %v614
    %v654 = vunpack.c.l.b16 %v615
    %v655 = vunpack.c.l.b16 %v616
    %v656 = vunpack.c.l.b16 %v617
    %v657 = vunpack.c.l.b16 %v618
    %v658 = vunpack.c.l.b16 %v619
    %v659 = vunpack.c.l.b16 %v620
    %v660 = vunpack.c.l.b16 %v621
    %v661 = vunpack.c.l.b16 %v622
    %v662 = vunpack.c.l.b16 %v623
    %v663 = vunpack.c.l.b16 %v624
    %v664 = vunpack.c.l.b16 %v625
    %v665 = vunpack.c.l.b16 %v626
    %v666 = vpack.c.b16 %v651, %v650
    %v667 = vpack.c.b16 %v653, %v652
    %v668 = vpack.c.b16 %v655, %v654
    %v669 = vpack.c.b16 %v657, %v656
    %v670 = vpack.c.b16 %v659, %v658
    %v671 = vpack.c.b16 %v661, %v660
    %v672 = vpack.c.b16 %v663, %v662
    %v673 = vpack.c.b16 %v665, %v664
    %682 = vmatprep.subr.bf16.mxu0 0
    %683 = vmatpush1.bf16.msra.mxu0 %v666
    %684 = vmatprep.subr.bf16.mxu0 0
    %685 = vmatpush1.bf16.msra.mxu0 %v667
    %686 = vmatprep.subr.bf16.mxu0 0
    %687 = vmatpush1.bf16.msra.mxu0 %v668
    %688 = vmatprep.subr.bf16.mxu0 0
    %689 = vmatpush1.bf16.msra.mxu0 %v669
    %690 = vmatprep.subr.bf16.mxu0 0
    %691 = vmatpush1.bf16.msra.mxu0 %v670
    %692 = vmatprep.subr.bf16.mxu0 0
    %693 = vmatpush1.bf16.msra.mxu0 %v671
    %694 = vmatprep.subr.bf16.mxu0 0
    %695 = vmatpush1.bf16.msra.mxu0 %v672
    %696 = vmatprep.subr.bf16.mxu0 0
    %697 = vmatpush1.bf16.msra.mxu0 %v673
    %698 = vmatprep.subr.bf16.mxu0 0
    %699 = vmatpush1.bf16.msra.mxu0 0
    %700 = vmatprep.subr.bf16.mxu0 0
    %701 = vmatpush1.bf16.msra.mxu0 0
    %702 = vmatprep.subr.bf16.mxu0 0
    %703 = vmatpush1.bf16.msra.mxu0 0
    %704 = vmatprep.subr.bf16.mxu0 0
    %705 = vmatpush1.bf16.msra.mxu0 0
    %706 = vmatprep.subr.bf16.mxu0 0
    %707 = vmatpush1.bf16.msra.mxu0 0
    %708 = vmatprep.subr.bf16.mxu0 0
    %709 = vmatpush1.bf16.msra.mxu0 0
    %710 = vmatprep.subr.bf16.mxu0 0
    %711 = vmatpush1.bf16.msra.mxu0 0
    %712 = vmatprep.subr.bf16.mxu0 0
    %713 = vmatpush1.bf16.msra.mxu0 0
    %714 = vmatprep.mubr.bf16.mxu0 0
    %715 = vmatmul.mubr.bf16.gmra.mrb[0].mxu0 %v610
    %v716 = vpop.f32.mrb[0].mxu0
    %v717 = vadd.f32 %v632, %v716
    %v718 = vpop.f32.mrb[0].mxu0
    %v719 = vpop.f32.mrb[0].mxu0
    %v720 = vpop.f32.mrb[0].mxu0
    %721 = vdwg.mxu0
    %v722 = vadd.f32 %v148, %v717
    %v723 = vpack.c.bf16 %v609, %v609
    %724 = vmatprep.subr.bf16.mxu0 0
    %725 = vmatpush1.bf16.msra.mxu0 %v666
    %726 = vmatprep.subr.bf16.mxu0 0
    %727 = vmatpush1.bf16.msra.mxu0 %v667
    %728 = vmatprep.subr.bf16.mxu0 0
    %729 = vmatpush1.bf16.msra.mxu0 %v668
    %730 = vmatprep.subr.bf16.mxu0 0
    %731 = vmatpush1.bf16.msra.mxu0 %v669
    %732 = vmatprep.subr.bf16.mxu0 0
    %733 = vmatpush1.bf16.msra.mxu0 %v670
    %734 = vmatprep.subr.bf16.mxu0 0
    %735 = vmatpush1.bf16.msra.mxu0 %v671
    %736 = vmatprep.subr.bf16.mxu0 0
    %737 = vmatpush1.bf16.msra.mxu0 %v672
    %738 = vmatprep.subr.bf16.mxu0 0
    %739 = vmatpush1.bf16.msra.mxu0 %v673
    %740 = vmatprep.subr.bf16.mxu0 0
    %741 = vmatpush1.bf16.msra.mxu0 0
    %742 = vmatprep.subr.bf16.mxu0 0
    %743 = vmatpush1.bf16.msra.mxu0 0
    %744 = vmatprep.subr.bf16.mxu0 0
    %745 = vmatpush1.bf16.msra.mxu0 0
    %746 = vmatprep.subr.bf16.mxu0 0
    %747 = vmatpush1.bf16.msra.mxu0 0
    %748 = vmatprep.subr.bf16.mxu0 0
    %749 = vmatpush1.bf16.msra.mxu0 0
    %750 = vmatprep.subr.bf16.mxu0 0
    %751 = vmatpush1.bf16.msra.mxu0 0
    %752 = vmatprep.subr.bf16.mxu0 0
    %753 = vmatpush1.bf16.msra.mxu0 0
    %754 = vmatprep.subr.bf16.mxu0 0
    %755 = vmatpush1.bf16.msra.mxu0 0
    %756 = vmatprep.mubr.bf16.mxu0 0
    %757 = vmatmul.mubr.bf16.gmra.mrb[0].mxu0 %v723
    %v758 = vpop.f32.mrb[0].mxu0
    %v759 = vadd.f32 %v632, %v758
    %v760 = vpop.f32.mrb[0].mxu0
    %v761 = vpop.f32.mrb[0].mxu0
    %v762 = vpop.f32.mrb[0].mxu0
    %763 = vdwg.mxu0
    %v764 = vadd.f32 %v164, %v759
    %v765 = vpack.c.bf16 %v722, %v722
    %v766 = vld [vmem:[#allocation10] sm:$0xf]
    %v767 = vld [vmem:[#allocation10 + $0x4] sm:$0xf]
    %v768 = vld [vmem:[#allocation10 + $0x8] sm:$0xf]
    %v769 = vld [vmem:[#allocation10 + $0xc] sm:$0xf]
    %v770 = vld [vmem:[#allocation10 + $0x10] sm:$0xf]
    %v771 = vld [vmem:[#allocation10 + $0x14] sm:$0xf]
    %v772 = vld [vmem:[#allocation10 + $0x18] sm:$0xf]
    %v773 = vld [vmem:[#allocation10 + $0x1c] sm:$0xf]
    %v774 = vld [vmem:[#allocation10 + $0x20] sm:$0xf]
    %v775 = vld [vmem:[#allocation10 + $0x24] sm:$0xf]
    %v776 = vld [vmem:[#allocation10 + $0x28] sm:$0xf]
    %v777 = vld [vmem:[#allocation10 + $0x2c] sm:$0xf]
    %v778 = vld [vmem:[#allocation10 + $0x30] sm:$0xf]
    %v779 = vld [vmem:[#allocation10 + $0x34] sm:$0xf]
    %v780 = vld [vmem:[#allocation10 + $0x38] sm:$0xf]
    %v781 = vld [vmem:[#allocation10 + $0x3c] sm:$0xf]
    %v782 = vpack.c.bf16 %v764, %v764
    %v783 = vld [vmem:[#allocation11] sm:$0xf]
    %v784 = vld [vmem:[#allocation11 + $0x4] sm:$0xf]
    %v785 = vld [vmem:[#allocation11 + $0x8] sm:$0xf]
    %v786 = vld [vmem:[#allocation11 + $0xc] sm:$0xf]
    %v787 = vld [vmem:[#allocation11 + $0x10] sm:$0xf]
    %v788 = vld [vmem:[#allocation11 + $0x14] sm:$0xf]
    %v789 = vld [vmem:[#allocation11 + $0x18] sm:$0xf]
    %v790 = vld [vmem:[#allocation11 + $0x1c] sm:$0xf]
    %v791 = vld [vmem:[#allocation11 + $0x20] sm:$0xf]
    %v792 = vld [vmem:[#allocation11 + $0x24] sm:$0xf]
    %v793 = vld [vmem:[#allocation11 + $0x28] sm:$0xf]
    %v794 = vld [vmem:[#allocation11 + $0x2c] sm:$0xf]
    %v795 = vld [vmem:[#allocation11 + $0x30] sm:$0xf]
    %v796 = vld [vmem:[#allocation11 + $0x34] sm:$0xf]
    %v797 = vld [vmem:[#allocation11 + $0x38] sm:$0xf]
    %v798 = vld [vmem:[#allocation11 + $0x3c] sm:$0xf]
    %v815 = vunpack.c.l.b16 %v783
    %v816 = vunpack.c.l.b16 %v784
    %v817 = vunpack.c.l.b16 %v785
    %v818 = vunpack.c.l.b16 %v786
    %v819 = vunpack.c.l.b16 %v787
    %v820 = vunpack.c.l.b16 %v788
    %v821 = vunpack.c.l.b16 %v789
    %v822 = vunpack.c.l.b16 %v790
    %v823 = vunpack.c.l.b16 %v791
    %v824 = vunpack.c.l.b16 %v792
    %v825 = vunpack.c.l.b16 %v793
    %v826 = vunpack.c.l.b16 %v794
    %v827 = vunpack.c.l.b16 %v795
    %v828 = vunpack.c.l.b16 %v796
    %v829 = vunpack.c.l.b16 %v797
    %v830 = vunpack.c.l.b16 %v798
    %v831 = vpack.c.b16 %v816, %v815
    %v832 = vpack.c.b16 %v818, %v817
    %v833 = vpack.c.b16 %v820, %v819
    %v834 = vpack.c.b16 %v822, %v821
    %v835 = vpack.c.b16 %v824, %v823
    %v836 = vpack.c.b16 %v826, %v825
    %v837 = vpack.c.b16 %v828, %v827
    %v838 = vpack.c.b16 %v830, %v829
    %847 = vmatprep.subr.bf16.mxu0 0
    %848 = vmatpush1.bf16.msra.mxu0 %v831
    %849 = vmatprep.subr.bf16.mxu0 0
    %850 = vmatpush1.bf16.msra.mxu0 %v832
    %851 = vmatprep.subr.bf16.mxu0 0
    %852 = vmatpush1.bf16.msra.mxu0 %v833
    %853 = vmatprep.subr.bf16.mxu0 0
    %854 = vmatpush1.bf16.msra.mxu0 %v834
    %855 = vmatprep.subr.bf16.mxu0 0
    %856 = vmatpush1.bf16.msra.mxu0 %v835
    %857 = vmatprep.subr.bf16.mxu0 0
    %858 = vmatpush1.bf16.msra.mxu0 %v836
    %859 = vmatprep.subr.bf16.mxu0 0
    %860 = vmatpush1.bf16.msra.mxu0 %v837
    %861 = vmatprep.subr.bf16.mxu0 0
    %862 = vmatpush1.bf16.msra.mxu0 %v838
    %863 = vmatprep.subr.bf16.mxu0 0
    %864 = vmatpush1.bf16.msra.mxu0 0
    %865 = vmatprep.subr.bf16.mxu0 0
    %866 = vmatpush1.bf16.msra.mxu0 0
    %867 = vmatprep.subr.bf16.mxu0 0
    %868 = vmatpush1.bf16.msra.mxu0 0
    %869 = vmatprep.subr.bf16.mxu0 0
    %870 = vmatpush1.bf16.msra.mxu0 0
    %871 = vmatprep.subr.bf16.mxu0 0
    %872 = vmatpush1.bf16.msra.mxu0 0
    %873 = vmatprep.subr.bf16.mxu0 0
    %874 = vmatpush1.bf16.msra.mxu0 0
    %875 = vmatprep.subr.bf16.mxu0 0
    %876 = vmatpush1.bf16.msra.mxu0 0
    %877 = vmatprep.subr.bf16.mxu0 0
    %878 = vmatpush1.bf16.msra.mxu0 0
    %879 = vmatprep.mubr.bf16.mxu0 0
    %880 = vmatmul.mubr.bf16.gmra.mrb[0].mxu0 %v782
    %v881 = vpop.f32.mrb[0].mxu0
    %v882 = vadd.f32 0.0, %v881
    %v883 = vpop.f32.mrb[0].mxu0
    %v884 = vpop.f32.mrb[0].mxu0
    %v885 = vpop.f32.mrb[0].mxu0
    %886 = vdwg.mxu0
    %v903 = vunpack.c.l.b16 %v766
    %v904 = vunpack.c.l.b16 %v767
    %v905 = vunpack.c.l.b16 %v768
    %v906 = vunpack.c.l.b16 %v769
    %v907 = vunpack.c.l.b16 %v770
    %v908 = vunpack.c.l.b16 %v771
    %v909 = vunpack.c.l.b16 %v772
    %v910 = vunpack.c.l.b16 %v773
    %v911 = vunpack.c.l.b16 %v774
    %v912 = vunpack.c.l.b16 %v775
    %v913 = vunpack.c.l.b16 %v776
    %v914 = vunpack.c.l.b16 %v777
    %v915 = vunpack.c.l.b16 %v778
    %v916 = vunpack.c.l.b16 %v779
    %v917 = vunpack.c.l.b16 %v780
    %v918 = vunpack.c.l.b16 %v781
    %v919 = vpack.c.b16 %v904, %v903
    %v920 = vpack.c.b16 %v906, %v905
    %v921 = vpack.c.b16 %v908, %v907
    %v922 = vpack.c.b16 %v910, %v909
    %v923 = vpack.c.b16 %v912, %v911
    %v924 = vpack.c.b16 %v914, %v913
    %v925 = vpack.c.b16 %v916, %v915
    %v926 = vpack.c.b16 %v918, %v917
    %935 = vmatprep.subr.bf16.mxu0 0
    %936 = vmatpush1.bf16.msra.mxu0 %v919
    %937 = vmatprep.subr.bf16.mxu0 0
    %938 = vmatpush1.bf16.msra.mxu0 %v920
    %939 = vmatprep.subr.bf16.mxu0 0
    %940 = vmatpush1.bf16.msra.mxu0 %v921
    %941 = vmatprep.subr.bf16.mxu0 0
    %942 = vmatpush1.bf16.msra.mxu0 %v922
    %943 = vmatprep.subr.bf16.mxu0 0
    %944 = vmatpush1.bf16.msra.mxu0 %v923
    %945 = vmatprep.subr.bf16.mxu0 0
    %946 = vmatpush1.bf16.msra.mxu0 %v924
    %947 = vmatprep.subr.bf16.mxu0 0
    %948 = vmatpush1.bf16.msra.mxu0 %v925
    %949 = vmatprep.subr.bf16.mxu0 0
    %950 = vmatpush1.bf16.msra.mxu0 %v926
    %951 = vmatprep.subr.bf16.mxu0 0
    %952 = vmatpush1.bf16.msra.mxu0 0
    %953 = vmatprep.subr.bf16.mxu0 0
    %954 = vmatpush1.bf16.msra.mxu0 0
    %955 = vmatprep.subr.bf16.mxu0 0
    %956 = vmatpush1.bf16.msra.mxu0 0
    %957 = vmatprep.subr.bf16.mxu0 0
    %958 = vmatpush1.bf16.msra.mxu0 0
    %959 = vmatprep.subr.bf16.mxu0 0
    %960 = vmatpush1.bf16.msra.mxu0 0
    %961 = vmatprep.subr.bf16.mxu0 0
    %962 = vmatpush1.bf16.msra.mxu0 0
    %963 = vmatprep.subr.bf16.mxu0 0
    %964 = vmatpush1.bf16.msra.mxu0 0
    %965 = vmatprep.subr.bf16.mxu0 0
    %966 = vmatpush1.bf16.msra.mxu0 0
    %967 = vmatprep.mubr.bf16.mxu0 0
    %968 = vmatmul.mubr.bf16.gmra.mrb[0].mxu0 %v765
    %v969 = vpop.f32.mrb[0].mxu0
    %v970 = vadd.f32 %v882, %v969
    %v971 = vpop.f32.mrb[0].mxu0
    %v972 = vpop.f32.mrb[0].mxu0
    %v973 = vpop.f32.mrb[0].mxu0
    %974 = vdwg.mxu0
    %v975 = vld [vmem:[%s10] sm:$0x1]
    %v977 = vlaneseq
    %v978 = vshrl.u32 %v977, 7
    %v979 = vsub.s32 0, %v978
    %v980 = vrot.slane %v975, %v979
    %v982 = vadd.f32 %v970, %v980
    %983 = vst [vmem:[#allocation13] sm:$0xff] %v982
    // Predicated region
    $region70: #{tpu_custom_call.1} parent=1 // pred_check
      _
    $region71: #{tpu_custom_call.1} parent=1 // pred_check_branch
      %985 = sbr.rel (0) target = $region73
    $region72: #{tpu_custom_call.1} parent=1 // pred_region
      %s987 = ssub.s32 128, 128
      %988 = vsyncadd [#allocation4], %s987
      %s990 = sshll.u32 [#allocation13], 4
      %s991 = int_to_ptr.vmem [resolvable:$true] %s990
      %993 = dma.vmem_to_hbm [thread:$0]  %s991, 128, %s11, [#allocation4]
    $region73: #{tpu_custom_call.1} parent=1 // pred_fallthru
      _
    // Predicated region
    $region74: #{tpu_custom_call.1} parent=1 // pred_check
      _
    $region75: #{tpu_custom_call.1} parent=1 // pred_check_branch
      %995 = sbr.rel (0) target = $region77
    $region76: #{tpu_custom_call.1} parent=1 // pred_region
      %996 = dma.done [#allocation4], 128
    $region77: #{tpu_custom_call.1} parent=1 // pred_fallthru
      _
    %997 = vsyncpa [#allocation3], 1
    %998 = vsyncpa [#allocation6], 1
    %999 = vsyncpa [#allocation9], 1
    %1000 = vsyncpa [#allocation12], 1
    %1001 = vsyncpa [#allocation4], 1

</llo_original>
